<compile_context>
chip_gen: v6e
topology: v6e:2x2x1
jax: 0.10.0
libtpu: 0.0.40
codegen_flags: <defaults>
</compile_context>

<pallas_src>
import functools

import jax
import jax.numpy as jnp
from jax.experimental import pallas as pl
from jax.experimental.pallas import tpu as pltpu


def _ffn_kernel(x_ref, wg_ref, wu_ref, wo_ref, o_ref, acc_ref):
    # x_ref:   (tm, H)   native dtype
    # wg_ref:  (H, ti)   gate weight tile
    # wu_ref:  (H, ti)   up weight tile
    # wo_ref:  (ti, H)   down-projection weight tile
    # o_ref:   (tm, H)
    # acc_ref: (tm, H)   f32 accumulator (persists across the I grid axis)
    j = pl.program_id(1)

    @pl.when(j == 0)
    def _():
        acc_ref[...] = jnp.zeros_like(acc_ref)

    x = x_ref[...]  # keep native dtype -> full-rate MXU; accumulate in f32
    gate = jnp.dot(x, wg_ref[...], preferred_element_type=jnp.float32)
    up = jnp.dot(x, wu_ref[...], preferred_element_type=jnp.float32)
    h = gate * jax.nn.sigmoid(gate) * up  # SiLU(gate) * up, in f32

    acc_ref[...] += jnp.dot(
        h.astype(wo_ref.dtype), wo_ref[...], preferred_element_type=jnp.float32
    )

    @pl.when(j == pl.num_programs(1) - 1)
    def _():
        o_ref[...] = acc_ref[...].astype(o_ref.dtype)


def _round_up(n, m):
    return ((n + m - 1) // m) * m


@functools.lru_cache(maxsize=None)
def _vmem_capacity_bytes():
    """Physical per-core VMEM; falls back to the v7x floor (64 MiB)."""
    try:
        return int(pltpu.get_tpu_info().vmem_capacity_bytes)
    except Exception:
        return 64 << 20


def _vmem_estimate(tm, ti, H, xb, wb):
    """Estimated VMEM footprint, including in-kernel f32 matmul intermediates."""
    return (
        2 * tm * H * xb        # x tile, double-buffered
        + 2 * 2 * H * ti * wb  # gate + up weight tiles, double-buffered
        + 2 * ti * H * wb      # down-proj weight tile, double-buffered
        + 2 * tm * H * xb      # output tile, double-buffered
        + tm * H * 4           # f32 accumulator scratch
        + 4 * tm * ti * 4      # gate/up/h f32 temporaries + low-precision h copy
    )


@functools.partial(jax.jit, static_argnames=("block_tokens", "block_inter"))
def cpm_ffn(x, w_gate, w_up, w_out, *, block_tokens=None, block_inter=None):
    """SwiGLU FFN:  (silu(x @ w_gate) * (x @ w_up)) @ w_out.

    x:      [T, H]
    w_gate: [H, I]  (gate half of gate_up_proj, pre-transposed)
    w_up:   [H, I]  (up   half of gate_up_proj, pre-transposed)
    w_out:  [I, H]  (w_out, pre-transposed)
    """
    T, H = x.shape
    I = w_gate.shape[1]
    assert w_up.shape == (H, I)
    assert w_out.shape == (I, H)

    xb = x.dtype.itemsize
    wb = w_gate.dtype.itemsize

    vmem_cap = _vmem_capacity_bytes()
    budget = min(int(0.80 * vmem_cap), 100 << 20)

    # ---- token tile -----------------------------------------------------------
    # Dtype-aware sublane rounding (8 for f32, 16 for bf16, 32 for int8/fp8);
    # 128-aligned once T >= 128; cap at 512 so weight streaming is amortized
    # over enough rows to sit near the MXU roofline on v6e/v7x.
    sub = max(8, 32 // xb)
    if block_tokens is not None:
        tm = block_tokens
    else:
        tm = min(512, _round_up(T, 128 if T >= 128 else sub))

    # ---- intermediate tile candidates ----------------------------------------
    ti_cands = [c for c in (1024, 512, 256, 128) if I % c == 0]
    Ip = I
    if not ti_cands:
        # Non-tileable intermediate size: zero-pad (padded h meets zero rows of
        # w_out, contributing exactly zero).
        Ip = _round_up(I, 256)
        ti_cands = [c for c in (1024, 512, 256) if Ip % c == 0]

    # ---- budget-aware tile selection -----------------------------------------
    if block_inter is not None:
        ti = block_inter
        assert Ip % ti == 0, "block_inter must divide the (padded) intermediate size"
    else:
        if block_tokens is not None:
            tm_cands = [tm]
        else:
            tm_cands = [tm] + [c for c in (384, 256, 128, sub) if c < tm]
        ti = None
        for tm_try in tm_cands:
            for ti_try in ti_cands:
                if _vmem_estimate(tm_try, ti_try, H, xb, wb) <= budget:
                    tm, ti = tm_try, ti_try
                    break
            if ti is not None:
                break
        if ti is None:  # last-resort fallback: smallest tiles
            tm, ti = tm_cands[-1], ti_cands[-1]

    # ---- padding --------------------------------------------------------------
    if Ip != I:
        w_gate = jnp.pad(w_gate, ((0, 0), (0, Ip - I)))
        w_up = jnp.pad(w_up, ((0, 0), (0, Ip - I)))
        w_out = jnp.pad(w_out, ((0, Ip - I), (0, 0)))

    Tp = _round_up(T, tm)
    x_p = x if Tp == T else jnp.pad(x, ((0, Tp - T), (0, 0)))

    grid = (Tp // tm, Ip // ti)

    # ---- VMEM limit / cost hint -----------------------------------------------
    est = _vmem_estimate(tm, ti, H, xb, wb)
    vmem_limit = int(min(0.90 * vmem_cap, max(32 << 20, 1.3 * est)))

    cost = pl.CostEstimate(
        flops=6 * Tp * H * Ip,  # gate + up + down-proj matmuls
        transcendentals=Tp * Ip,  # sigmoid
        bytes_accessed=(
            Tp * H * xb + (Tp // tm) * 3 * H * Ip * wb + Tp * H * xb
        ),
    )

    out = pl.pallas_call(
        _ffn_kernel,
        out_shape=jax.ShapeDtypeStruct((Tp, H), x.dtype),
        grid_spec=pltpu.PrefetchScalarGridSpec(
            num_scalar_prefetch=0,
            grid=grid,
            in_specs=[
                pl.BlockSpec((tm, H), lambda i, j: (i, 0)),   # x token tile
                pl.BlockSpec((H, ti), lambda i, j: (0, j)),   # gate weight tile
                pl.BlockSpec((H, ti), lambda i, j: (0, j)),   # up weight tile
                pl.BlockSpec((ti, H), lambda i, j: (j, 0)),   # down weight tile
            ],
            out_specs=pl.BlockSpec((tm, H), lambda i, j: (i, 0)),
            scratch_shapes=[pltpu.VMEM((tm, H), jnp.float32)],
        ),
        compiler_params=pltpu.CompilerParams(
            dimension_semantics=("parallel", "arbitrary"),
            vmem_limit_bytes=vmem_limit,
        ),
        cost_estimate=cost,
    )(x_p, w_gate, w_up, w_out)

    return out[:T] if Tp != T else out


def cpm_ffn_merged(x, w_gate_up, w_out, **kw):
    """Convenience wrapper taking the merged [H, 2*I] gate_up weight."""
    I = w_out.shape[0]
    return cpm_ffn(x, w_gate_up[:, :I], w_gate_up[:, I:], w_out, **kw)


def cpm_ffn_reference(x, w_gate_up, w_out):
    """Pure-JAX reference with identical semantics (for verification)."""
    gate_up = x.astype(jnp.float32) @ w_gate_up.astype(jnp.float32)
    I = w_out.shape[0]
    gate, up = gate_up[:, :I], gate_up[:, I:]
    h = gate * jax.nn.sigmoid(gate) * up
    return (h @ w_out.astype(jnp.float32)).astype(x.dtype)


if __name__ == "__main__":
    # Small but lane-aligned shapes (multiples of 128) so the tiled path is
    # exercised; T=200 also exercises token padding + the ragged final tile.
    T, H, I = 200, 256, 512

    key = jax.random.PRNGKey(0)
    kx, kgu, ko = jax.random.split(key, 3)

    x = jax.random.normal(kx, (T, H), dtype=jnp.float32)
    # Module weights (torch): gate_up_proj [2*I, H], w_out [H, I].
    # Stored pre-transposed for the kernel: [H, 2*I] and [I, H].
    w_gate_up = jax.random.normal(kgu, (H, 2 * I), dtype=jnp.float32) * 0.05
    w_out = jax.random.normal(ko, (I, H), dtype=jnp.float32) * 0.05

    ref = cpm_ffn_reference(x, w_gate_up, w_out)

    # Explicit small tiles: grid (2 token tiles x 2 reduction steps).
    out = cpm_ffn_merged(x, w_gate_up, w_out, block_tokens=128, block_inter=256)
    out = jax.block_until_ready(out)
    assert out.shape == (T, H)
    assert jnp.allclose(out, ref, atol=2e-3, rtol=2e-3), "mismatch vs reference (explicit tiles)"

    # Auto (budget-aware) tile selection path.
    out_auto = cpm_ffn_merged(x, w_gate_up, w_out)
    out_auto = jax.block_until_ready(out_auto)
    assert out_auto.shape == (T, H)
    assert jnp.allclose(out_auto, ref, atol=2e-3, rtol=2e-3), "mismatch vs reference (auto tiles)"

    print("KERNEL_OK")
</pallas_src>

<mosaic_0001>
module attributes {stable_mosaic.version = 11 : i64} {
  func.func @_ffn_kernel(%arg0: i32, %arg1: i32, %arg2: memref<128x256xf32, #tpu.memory_space<vmem>>, %arg3: memref<256x256xf32, #tpu.memory_space<vmem>>, %arg4: memref<256x256xf32, #tpu.memory_space<vmem>>, %arg5: memref<256x256xf32, #tpu.memory_space<vmem>>, %arg6: memref<128x256xf32, #tpu.memory_space<vmem>>, %arg7: memref<128x256xf32, #tpu.memory_space<vmem>>) attributes {dimension_semantics = [#tpu.dimension_semantics<parallel>, #tpu.dimension_semantics<arbitrary>], iteration_bounds = array<i64: 2, 2>, scalar_prefetch = 0 : i64, scratch_operands = 1 : i64, tpu.core_type = #tpu.core_type<tc>, window_params = [{transform_indices = @transform_0, window_bounds = array<i64: 128, 256>}, {transform_indices = @transform_1, window_bounds = array<i64: 256, 256>}, {transform_indices = @transform_2, window_bounds = array<i64: 256, 256>}, {transform_indices = @transform_3, window_bounds = array<i64: 256, 256>}, {transform_indices = @transform_4, window_bounds = array<i64: 128, 256>}]} {
    %c0_i32 = arith.constant 0 : i32
    %0 = arith.cmpi eq, %arg1, %c0_i32 : i32
    %1 = arith.extui %0 : i1 to i32
    %c0_i32_0 = arith.constant 0 : i32
    %2 = arith.cmpi ne, %1, %c0_i32_0 : i32
    scf.if %2 {
      %cst_16 = arith.constant 0.000000e+00 : f32
      %23 = vector.broadcast %cst_16 : f32 to vector<128x256xf32>
      %c0_17 = arith.constant 0 : index
      %c0_18 = arith.constant 0 : index
      %24 = vector.load %arg7[%c0_17, %c0_18] : memref<128x256xf32, #tpu.memory_space<vmem>>, vector<128x256xf32>
      tpu.vector_store %arg7[%c0_17, %c0_18], %23 {strides = array<i32>} : memref<128x256xf32, #tpu.memory_space<vmem>>, vector<128x256xf32>,
    } else {
    }
    %c0 = arith.constant 0 : index
    %c0_1 = arith.constant 0 : index
    %3 = vector.load %arg2[%c0, %c0_1] : memref<128x256xf32, #tpu.memory_space<vmem>>, vector<128x256xf32>
    %c0_2 = arith.constant 0 : index
    %c0_3 = arith.constant 0 : index
    %4 = vector.load %arg3[%c0_2, %c0_3] : memref<256x256xf32, #tpu.memory_space<vmem>>, vector<256x256xf32>
    %cst = arith.constant dense<0.000000e+00> : vector<128x256xf32>
    %5 = tpu.matmul %3, %4, %cst {dimension_numbers = #tpu.dot_dimension_numbers<[1], [0], [0], [1], [0, 0, 1, 1], [], []>} : vector<128x256xf32>, vector<256x256xf32>, vector<128x256xf32> -> vector<128x256xf32>
    %c0_4 = arith.constant 0 : index
    %c0_5 = arith.constant 0 : index
    %6 = vector.load %arg4[%c0_4, %c0_5] : memref<256x256xf32, #tpu.memory_space<vmem>>, vector<256x256xf32>
    %cst_6 = arith.constant dense<0.000000e+00> : vector<128x256xf32>
    %7 = tpu.matmul %3, %6, %cst_6 {dimension_numbers = #tpu.dot_dimension_numbers<[1], [0], [0], [1], [0, 0, 1, 1], [], []>} : vector<128x256xf32>, vector<256x256xf32>, vector<128x256xf32> -> vector<128x256xf32>
    %8 = arith.negf %5 : vector<128x256xf32>
    %9 = math.exp %8 : vector<128x256xf32>
    %cst_7 = arith.constant 1.000000e+00 : f32
    %10 = vector.broadcast %cst_7 : f32 to vector<128x256xf32>
    %11 = arith.addf %10, %9 : vector<128x256xf32>
    %12 = arith.divf %10, %11 : vector<128x256xf32>
    %13 = arith.mulf %5, %12 : vector<128x256xf32>
    %14 = arith.mulf %13, %7 : vector<128x256xf32>
    %c0_8 = arith.constant 0 : index
    %c0_9 = arith.constant 0 : index
    %15 = vector.load %arg7[%c0_8, %c0_9] : memref<128x256xf32, #tpu.memory_space<vmem>>, vector<128x256xf32>
    %c0_10 = arith.constant 0 : index
    %c0_11 = arith.constant 0 : index
    %16 = vector.load %arg5[%c0_10, %c0_11] : memref<256x256xf32, #tpu.memory_space<vmem>>, vector<256x256xf32>
    %cst_12 = arith.constant dense<0.000000e+00> : vector<128x256xf32>
    %17 = tpu.matmul %14, %16, %cst_12 {dimension_numbers = #tpu.dot_dimension_numbers<[1], [0], [0], [1], [0, 0, 1, 1], [], []>} : vector<128x256xf32>, vector<256x256xf32>, vector<128x256xf32> -> vector<128x256xf32>
    %18 = arith.addf %15, %17 : vector<128x256xf32>
    %c0_13 = arith.constant 0 : index
    %c0_14 = arith.constant 0 : index
    %19 = vector.load %arg7[%c0_13, %c0_14] : memref<128x256xf32, #tpu.memory_space<vmem>>, vector<128x256xf32>
    tpu.vector_store %arg7[%c0_13, %c0_14], %18 {strides = array<i32>} : memref<128x256xf32, #tpu.memory_space<vmem>>, vector<128x256xf32>,
    %c1_i32 = arith.constant 1 : i32
    %20 = arith.cmpi eq, %arg1, %c1_i32 : i32
    %21 = arith.extui %20 : i1 to i32
    %c0_i32_15 = arith.constant 0 : i32
    %22 = arith.cmpi ne, %21, %c0_i32_15 : i32
    scf.if %22 {
      %c0_16 = arith.constant 0 : index
      %c0_17 = arith.constant 0 : index
      %23 = vector.load %arg7[%c0_16, %c0_17] : memref<128x256xf32, #tpu.memory_space<vmem>>, vector<128x256xf32>
      %c0_18 = arith.constant 0 : index
      %c0_19 = arith.constant 0 : index
      %24 = vector.load %arg6[%c0_18, %c0_19] : memref<128x256xf32, #tpu.memory_space<vmem>>, vector<128x256xf32>
      tpu.vector_store %arg6[%c0_18, %c0_19], %23 {strides = array<i32>} : memref<128x256xf32, #tpu.memory_space<vmem>>, vector<128x256xf32>,
    } else {
    }
    return
  }
  func.func @transform_0(%arg0: i32, %arg1: i32) -> (i32, i32) {
    %c0_i32 = arith.constant 0 : i32
    %c0_i32_0 = arith.constant 0 : i32
    return %arg0, %c0_i32 : i32, i32
  }
  func.func @transform_1(%arg0: i32, %arg1: i32) -> (i32, i32) {
    %c0_i32 = arith.constant 0 : i32
    %c0_i32_0 = arith.constant 0 : i32
    return %c0_i32, %arg1 : i32, i32
  }
  func.func @transform_2(%arg0: i32, %arg1: i32) -> (i32, i32) {
    %c0_i32 = arith.constant 0 : i32
    %c0_i32_0 = arith.constant 0 : i32
    return %c0_i32, %arg1 : i32, i32
  }
  func.func @transform_3(%arg0: i32, %arg1: i32) -> (i32, i32) {
    %c0_i32 = arith.constant 0 : i32
    %c0_i32_0 = arith.constant 0 : i32
    return %arg1, %c0_i32 : i32, i32
  }
  func.func @transform_4(%arg0: i32, %arg1: i32) -> (i32, i32) {
    %c0_i32 = arith.constant 0 : i32
    %c0_i32_0 = arith.constant 0 : i32
    return %arg0, %c0_i32 : i32, i32
  }
}

</mosaic_0001>

<llo_original>
// kernel: cpm_ffn.1
$region0: #{cpm_ffn.1}
  #allocation0 [shape = 'u32[]', space=smem, size = 0x4, offset = 0x4, fixed_abs, tag = 'smem constant byte address 0x4 - core index']
  #allocation1 [shape = 'u32[144,128]{1,0:T(1,128)}', space=vmem, size = 0x12000, scoped, tag = 'internal scratch']
  #allocation2 [shape = 'f32[128,256]{1,0:T(8,128)}', space=vmem, size = 0x20000, scoped, tag = 'scratch operand']
  %s0 = inlined_call_operand.vmem [shape: f32[256,256], index: 0, kind: input, shape index: {}]
  %s1 = inlined_call_operand.hbm [shape: f32[256,512], index: 1, kind: input, shape index: {}]
  %s2 = inlined_call_operand.hbm [shape: f32[256,512], index: 2, kind: input, shape index: {}]
  %s3 = inlined_call_operand.hbm [shape: f32[512,256], index: 3, kind: input, shape index: {}]
  %s4 = inlined_call_operand.vmem [shape: f32[256,256], index: 4, kind: output, shape index: {}]
  %s5 = sld [smem:[#allocation0]]
  $region69: #{cpm_ffn.1} parent=0
    _
  %s7 = ssub.s32 1, %s5
  %s8 = scalar_select 0, %s7, %s5
  $region1: #{cpm_ffn.1} parent=0
    #allocation3 [shape = 'u8[524288]{0}', space=vmem, size = 0x80000, scoped, tag = 'input window, operand 1']
    #allocation4 [shape = 's32[2]{0}', space=sflag, size = 0x8, scoped, tag = 'scoped memory for cpm_ffn.1']
    #allocation5 [shape = 'u8[524288]{0}', space=vmem, size = 0x80000, scoped, tag = 'input window, operand 2']
    #allocation6 [shape = 's32[2]{0}', space=sflag, size = 0x8, scoped, tag = 'scoped memory for cpm_ffn.1']
    #allocation7 [shape = 'u8[524288]{0}', space=vmem, size = 0x80000, scoped, tag = 'input window, operand 3']
    %9 = vsyncpa [#allocation4], 0
    %s10 = scalar_lea.sflag [#allocation4], 1
    %11 = vsyncpa %s10, 0
    %12 = vsyncpa [#allocation6], 0
    %s13 = scalar_lea.sflag [#allocation6], 1
    %14 = vsyncpa %s13, 0
    loop: start=0, step=1, limit=6
    $region2: #{cpm_ffn.1} parent=1 // loop_pre_header
      _
    $region3: #{cpm_ffn.1} parent=1 // loop_header
      %s16 = sphi 0, %s20
      %p17 = scmp.ge.s32.totalorder %s16, 6
      %s23 = sphi 0, %s35
      %s24 = sphi 0, %s31
      %s25 = sphi 0, %s23
      %s26 = sphi 0, %s24
      %s27 = sphi 0, %s25
      %s28 = sphi 0, %s26
      %s38 = sphi 0, %s40
      %s41 = sphi 0, %s38
      %s42 = sphi 0, %s41
      %s58 = sphi 0, %s42
      %s64 = sphi 0, %s66
      %s67 = sphi 0, %s64
      %s68 = sphi 0, %s67
      %s84 = sphi 0, %s68
      %s90 = sphi 0, %s92
      %s93 = sphi 0, %s90
      %s94 = sphi 0, %s93
      %s110 = sphi 0, %s94
      %s116 = sphi 0, %s118
      %s119 = sphi 0, %s116
      %s120 = sphi 0, %s119
      %s136 = sphi 0, %s120
      %s142 = sphi 0, %s144
      %s145 = sphi 0, %s142
      %s146 = sphi 0, %s145
      %s162 = sphi 0, %s146
    $region4: #{cpm_ffn.1} parent=1 // loop_header_branch
      %19 = sbr.rel (%p17) target = $region8
    $region5: #{cpm_ffn.1} parent=1 // loop_body
      %s21 = ssub.s32 %s16, 1
      %s22 = ssub.s32 %s16, 2
      %s29 = sadd.s32 1, %s24
      %p30 = scmp.ge.s32.totalorder %s29, 2
      %s31 = scalar_select %p30, 0, %s29
      %s32 = sadd.s32 1, %s23
      %s33 = scalar_select %p30, %s32, %s23
      %p34 = scmp.ge.s32.totalorder %s33, 2
      %s35 = scalar_select %p34, 0, %s33
      %s36 = ssub.s32 %s23, %s35
      %p37 = scmp.eq.s32.totalorder %s36, 0
      %s39 = sadd.s32 %s38, 1
      %s40 = scalar_select %p37, %s38, %s39
      %p43 = pneg %p37
      %p44 = scmp.eq.s32.totalorder %s16, 3
      %p45 = por %p43, %p44
      %p46 = scmp.ne.s32.totalorder %s38, %s41
      %p47 = scmp.eq.s32.totalorder %s16, 0
      %p48 = por %p46, %p47
      %p49 = scmp.ne.s32.totalorder %s38, %s41
      %p50 = scmp.eq.s32.totalorder %s21, 3
      %p51 = por %p49, %p50
      %p52 = scmp.ne.s32.totalorder %s41, %s42
      %p53 = scmp.eq.s32.totalorder %s21, 0
      %p54 = por %p52, %p53
      %p55 = scmp.ne.s32.totalorder %s41, %s42
      %p56 = scmp.eq.s32.totalorder %s22, 3
      %p57 = por %p55, %p56
      %p59 = scmp.ne.s32.totalorder %s42, %s58
      %p60 = scmp.eq.s32.totalorder %s22, 0
      %p61 = por %p59, %p60
      %s62 = ssub.s32 %s24, %s31
      %p63 = scmp.eq.s32.totalorder %s62, 0
      %s65 = sadd.s32 %s64, 1
      %s66 = scalar_select %p63, %s64, %s65
      %p69 = pneg %p63
      %p70 = scmp.eq.s32.totalorder %s16, 3
      %p71 = por %p69, %p70
      %p72 = scmp.ne.s32.totalorder %s64, %s67
      %p73 = scmp.eq.s32.totalorder %s16, 0
      %p74 = por %p72, %p73
      %p75 = scmp.ne.s32.totalorder %s64, %s67
      %p76 = scmp.eq.s32.totalorder %s21, 3
      %p77 = por %p75, %p76
      %p78 = scmp.ne.s32.totalorder %s67, %s68
      %p79 = scmp.eq.s32.totalorder %s21, 0
      %p80 = por %p78, %p79
      %p81 = scmp.ne.s32.totalorder %s67, %s68
      %p82 = scmp.eq.s32.totalorder %s22, 3
      %p83 = por %p81, %p82
      %p85 = scmp.ne.s32.totalorder %s68, %s84
      %p86 = scmp.eq.s32.totalorder %s22, 0
      %p87 = por %p85, %p86
      %s88 = ssub.s32 %s24, %s31
      %p89 = scmp.eq.s32.totalorder %s88, 0
      %s91 = sadd.s32 %s90, 1
      %s92 = scalar_select %p89, %s90, %s91
      %p95 = pneg %p89
      %p96 = scmp.eq.s32.totalorder %s16, 3
      %p97 = por %p95, %p96
      %p98 = scmp.ne.s32.totalorder %s90, %s93
      %p99 = scmp.eq.s32.totalorder %s16, 0
      %p100 = por %p98, %p99
      %p101 = scmp.ne.s32.totalorder %s90, %s93
      %p102 = scmp.eq.s32.totalorder %s21, 3
      %p103 = por %p101, %p102
      %p104 = scmp.ne.s32.totalorder %s93, %s94
      %p105 = scmp.eq.s32.totalorder %s21, 0
      %p106 = por %p104, %p105
      %p107 = scmp.ne.s32.totalorder %s93, %s94
      %p108 = scmp.eq.s32.totalorder %s22, 3
      %p109 = por %p107, %p108
      %p111 = scmp.ne.s32.totalorder %s94, %s110
      %p112 = scmp.eq.s32.totalorder %s22, 0
      %p113 = por %p111, %p112
      %s114 = ssub.s32 %s24, %s31
      %p115 = scmp.eq.s32.totalorder %s114, 0
      %s117 = sadd.s32 %s116, 1
      %s118 = scalar_select %p115, %s116, %s117
      %p121 = pneg %p115
      %p122 = scmp.eq.s32.totalorder %s16, 3
      %p123 = por %p121, %p122
      %p124 = scmp.ne.s32.totalorder %s116, %s119
      %p125 = scmp.eq.s32.totalorder %s16, 0
      %p126 = por %p124, %p125
      %p127 = scmp.ne.s32.totalorder %s116, %s119
      %p128 = scmp.eq.s32.totalorder %s21, 3
      %p129 = por %p127, %p128
      %p130 = scmp.ne.s32.totalorder %s119, %s120
      %p131 = scmp.eq.s32.totalorder %s21, 0
      %p132 = por %p130, %p131
      %p133 = scmp.ne.s32.totalorder %s119, %s120
      %p134 = scmp.eq.s32.totalorder %s22, 3
      %p135 = por %p133, %p134
      %p137 = scmp.ne.s32.totalorder %s120, %s136
      %p138 = scmp.eq.s32.totalorder %s22, 0
      %p139 = por %p137, %p138
      %s140 = ssub.s32 %s23, %s35
      %p141 = scmp.eq.s32.totalorder %s140, 0
      %s143 = sadd.s32 %s142, 1
      %s144 = scalar_select %p141, %s142, %s143
      %p147 = pneg %p141
      %p148 = scmp.eq.s32.totalorder %s16, 3
      %p149 = por %p147, %p148
      %p150 = scmp.ne.s32.totalorder %s142, %s145
      %p151 = scmp.eq.s32.totalorder %s16, 0
      %p152 = por %p150, %p151
      %p153 = scmp.ne.s32.totalorder %s142, %s145
      %p154 = scmp.eq.s32.totalorder %s21, 3
      %p155 = por %p153, %p154
      %p156 = scmp.ne.s32.totalorder %s145, %s146
      %p157 = scmp.eq.s32.totalorder %s21, 0
      %p158 = por %p156, %p157
      %p159 = scmp.ne.s32.totalorder %s145, %s146
      %p160 = scmp.eq.s32.totalorder %s22, 3
      %p161 = por %p159, %p160
      %p163 = scmp.ne.s32.totalorder %s146, %s162
      %p164 = scmp.eq.s32.totalorder %s22, 0
      %p165 = por %p163, %p164
      %p166 = scmp.le.s32.totalorder 1, %s16
      %p167 = scmp.lt.s32.totalorder %s16, 5
      %p168 = pnand %p166, %p167
      %p169 = pneg %p168
      // Predicated region
      $region9: #{cpm_ffn.1} parent=5 // pred_check
        _
      $region10: #{cpm_ffn.1} parent=5 // pred_check_branch
        %171 = sbr.rel (%p168) target = $region12
      $region11: #{cpm_ffn.1} parent=5 // pred_region
        %s172 = ssub.s32 %s16, 1
      $region12: #{cpm_ffn.1} parent=5 // pred_fallthru
        _
      %p173 = scmp.lt.s32.totalorder %s16, 4
      // Predicated region
      $region13: #{cpm_ffn.1} parent=5 // pred_check
        %p174 = pneg %p173
      $region14: #{cpm_ffn.1} parent=5 // pred_check_branch
        %176 = sbr.rel (%p174) target = $region16
      $region15: #{cpm_ffn.1} parent=5 // pred_region
        // Predicated region
        $region17: #{cpm_ffn.1} parent=15 // pred_check
          %p177 = pneg %p48
        $region18: #{cpm_ffn.1} parent=15 // pred_check_branch
          %179 = sbr.rel (%p177) target = $region20
        $region19: #{cpm_ffn.1} parent=15 // pred_region
          %s180 = smul.u32 16, %s23
          %p181 = scmp.lt.s32.totalorder %s180, 31
          %s182 = scalar_select %p181, %s180, 31
          %s183 = smul.addr %s182, 2
          %s184 = smul.addr %s183, 8
          %s185 = scalar_lea.vmem %s0, %s184
          %s186 = smul.u32 16, %s23
        $region20: #{cpm_ffn.1} parent=15 // pred_fallthru
          _
        // Predicated region
        $region21: #{cpm_ffn.1} parent=15 // pred_check
          %p187 = pneg %p74
        $region22: #{cpm_ffn.1} parent=15 // pred_check_branch
          %189 = sbr.rel (%p187) target = $region24
        $region23: #{cpm_ffn.1} parent=15 // pred_region
          %s190 = sand.u32 %s64, 1
          %s191 = scalar_lea.sflag [#allocation4], %s190
          %s192 = sand.u32 %s64, 1
          %s193 = smul.addr %s192, 512
          %s194 = scalar_lea.vmem [#allocation3], %s193
          %s195 = smul.u32 2, %s24
          %s197 = ssub.s32 8192, 8192
          %198 = vsyncadd %s191, %s197
          %s199 = smul.addr %s195, 128
          %s200 = scalar_lea.hbm %s1, %s199
          %s201 = sshll.u32 %s194, 4
          %s202 = int_to_ptr.vmem [resolvable:$true] %s201
          %207 = dma.hbm_to_vmem [thread:$0]  %s200, 8192, %s202, %s191, 512, 256, 16
        $region24: #{cpm_ffn.1} parent=15 // pred_fallthru
          _
        // Predicated region
        $region25: #{cpm_ffn.1} parent=15 // pred_check
          %p208 = pneg %p100
        $region26: #{cpm_ffn.1} parent=15 // pred_check_branch
          %210 = sbr.rel (%p208) target = $region28
        $region27: #{cpm_ffn.1} parent=15 // pred_region
          %s211 = sand.u32 %s16, 1
          %s212 = scalar_lea.sflag [#allocation6], %s211
          %s213 = sand.u32 %s90, 1
          %s214 = smul.addr %s213, 512
          %s215 = scalar_lea.vmem [#allocation5], %s214
          %s216 = smul.u32 2, %s24
          %s218 = ssub.s32 8192, 8192
          %219 = vsyncadd %s212, %s218
          %s220 = smul.addr %s216, 128
          %s221 = scalar_lea.hbm %s2, %s220
          %s222 = sshll.u32 %s215, 4
          %s223 = int_to_ptr.vmem [resolvable:$true] %s222
          %228 = dma.hbm_to_vmem [thread:$0]  %s221, 8192, %s223, %s212, 512, 256, 16
        $region28: #{cpm_ffn.1} parent=15 // pred_fallthru
          _
        // Predicated region
        $region29: #{cpm_ffn.1} parent=15 // pred_check
          %p229 = pneg %p126
        $region30: #{cpm_ffn.1} parent=15 // pred_check_branch
          %231 = sbr.rel (%p229) target = $region32
        $region31: #{cpm_ffn.1} parent=15 // pred_region
          %s232 = sand.u32 %s16, 1
          %s233 = scalar_lea.sflag [#allocation6], %s232
          %s234 = sand.u32 %s116, 1
          %s235 = smul.addr %s234, 512
          %s236 = scalar_lea.vmem [#allocation7], %s235
          %s237 = smul.u32 32, %s24
          %s239 = ssub.s32 8192, 8192
          %240 = vsyncadd %s233, %s239
          %s241 = smul.addr %s237, 2
          %s242 = smul.addr %s241, 128
          %s243 = scalar_lea.hbm %s3, %s242
          %s244 = sshll.u32 %s236, 4
          %s245 = int_to_ptr.vmem [resolvable:$true] %s244
          %250 = dma.hbm_to_vmem [thread:$0]  %s243, 8192, %s245, %s233, 256, 256, 16
        $region32: #{cpm_ffn.1} parent=15 // pred_fallthru
          _
      $region16: #{cpm_ffn.1} parent=5 // pred_fallthru
        _
      %p251 = scmp.le.s32.totalorder 1, %s16
      %p252 = scmp.lt.s32.totalorder %s16, 5
      %p253 = pnand %p251, %p252
      %p254 = pneg %p253
      // Predicated region
      $region33: #{cpm_ffn.1} parent=5 // pred_check
        _
      $region34: #{cpm_ffn.1} parent=5 // pred_check_branch
        %256 = sbr.rel (%p253) target = $region36
      $region35: #{cpm_ffn.1} parent=5 // pred_region
        %s257 = ssub.s32 %s16, 1
        %s258 = sand.u32 %s67, 1
        %s259 = scalar_lea.sflag [#allocation4], %s258
        %s260 = sand.u32 %s67, 1
        %s261 = smul.addr %s260, 512
        %s262 = scalar_lea.vmem [#allocation3], %s261
        // Predicated region
        $region37: #{cpm_ffn.1} parent=35 // pred_check
          %p263 = pneg %p80
        $region38: #{cpm_ffn.1} parent=35 // pred_check_branch
          %265 = sbr.rel (%p263) target = $region40
        $region39: #{cpm_ffn.1} parent=35 // pred_region
          %266 = dma.done %s259, 8192
        $region40: #{cpm_ffn.1} parent=35 // pred_fallthru
          _
        %s267 = sand.u32 %s21, 1
        %s268 = scalar_lea.sflag [#allocation6], %s267
        %s269 = sand.u32 %s93, 1
        %s270 = smul.addr %s269, 512
        %s271 = scalar_lea.vmem [#allocation5], %s270
        // Predicated region
        $region41: #{cpm_ffn.1} parent=35 // pred_check
          %p272 = pneg %p106
        $region42: #{cpm_ffn.1} parent=35 // pred_check_branch
          %274 = sbr.rel (%p272) target = $region44
        $region43: #{cpm_ffn.1} parent=35 // pred_region
          %275 = dma.done %s268, 8192
        $region44: #{cpm_ffn.1} parent=35 // pred_fallthru
          _
        %s276 = sand.u32 %s21, 1
        %s277 = scalar_lea.sflag [#allocation6], %s276
        %s278 = sand.u32 %s119, 1
        %s279 = smul.addr %s278, 512
        %s280 = scalar_lea.vmem [#allocation7], %s279
        // Predicated region
        $region45: #{cpm_ffn.1} parent=35 // pred_check
          %p281 = pneg %p132
        $region46: #{cpm_ffn.1} parent=35 // pred_check_branch
          %283 = sbr.rel (%p281) target = $region48
        $region47: #{cpm_ffn.1} parent=35 // pred_region
          %284 = dma.done %s277, 8192
        $region48: #{cpm_ffn.1} parent=35 // pred_fallthru
          _
        %s285 = smul.u32 16, %s25
        %p286 = scmp.lt.s32.totalorder %s285, 31
        %s287 = scalar_select %p286, %s285, 31
        %s288 = smul.addr %s287, 2
        %s289 = smul.addr %s288, 8
        %s290 = scalar_lea.vmem %s0, %s289
        %p291 = pneg %p54
        %p292 = pneg %p51
        %s293 = sand.u32 %s67, 1
        %s294 = scalar_lea.sflag [#allocation4], %s293
        %s295 = sand.u32 %s67, 1
        %s296 = smul.addr %s295, 512
        %s297 = scalar_lea.vmem [#allocation3], %s296
        %p298 = pneg %p80
        %p299 = pneg %p77
        %s300 = sand.u32 %s21, 1
        %s301 = scalar_lea.sflag [#allocation6], %s300
        %s302 = sand.u32 %s93, 1
        %s303 = smul.addr %s302, 512
        %s304 = scalar_lea.vmem [#allocation5], %s303
        %p305 = pneg %p106
        %p306 = pneg %p103
        %s307 = sand.u32 %s21, 1
        %s308 = scalar_lea.sflag [#allocation6], %s307
        %s309 = sand.u32 %s119, 1
        %s310 = smul.addr %s309, 512
        %s311 = scalar_lea.vmem [#allocation7], %s310
        %p312 = pneg %p132
        %p313 = pneg %p129
        %p314 = pneg %p158
        %p315 = pneg %p155
        %s316 = smul.u32 16, %s25
        %p317 = scmp.lt.s32.totalorder %s316, 31
        %s318 = scalar_select %p317, %s316, 31
        %s319 = smul.addr %s318, 2
        %s320 = smul.addr %s319, 8
        %s321 = scalar_lea.vmem %s4, %s320
        %s322 = smul.u32 16, %s25
        %p323 = scmp.lt.s32.totalorder %s322, 31
        %s324 = scalar_select %p323, %s322, 31
        %s325 = smul.addr %s324, 2
        %s326 = smul.addr %s325, 8
        %s327 = scalar_lea.vmem %s0, %s326
        %s328 = smul.u32 16, %s25
        %s329 = smul.u32 2, %s26
        %s330 = smul.u32 2, %s26
        %s331 = smul.u32 32, %s26
        %s332 = smul.u32 16, %s25
        %p333 = scmp.lt.s32.totalorder %s332, 31
        %s334 = scalar_select %p333, %s332, 31
        %s335 = smul.addr %s334, 2
        %s336 = smul.addr %s335, 8
        %s337 = scalar_lea.vmem %s4, %s336
        %s338 = smul.u32 16, %s25
        %p339 = scmp.eq.s32.totalorder %s26, 0
        // Predicated region
        $region49: #{cpm_ffn.1} parent=35 // pred_check
          %p340 = pneg %p339
        $region50: #{cpm_ffn.1} parent=35 // pred_check_branch
          %342 = sbr.rel (%p340) target = $region52
        $region51: #{cpm_ffn.1} parent=35 // pred_region
          %343 = vst [vmem:[#allocation2] sm:$0xff] 0.0
          %344 = vst [vmem:[#allocation2 + $0x8] sm:$0xff] 0.0
          %345 = vst [vmem:[#allocation2 + $0x10] sm:$0xff] 0.0
          %346 = vst [vmem:[#allocation2 + $0x18] sm:$0xff] 0.0
          %347 = vst [vmem:[#allocation2 + $0x20] sm:$0xff] 0.0
          %348 = vst [vmem:[#allocation2 + $0x28] sm:$0xff] 0.0
          %349 = vst [vmem:[#allocation2 + $0x30] sm:$0xff] 0.0
          %350 = vst [vmem:[#allocation2 + $0x38] sm:$0xff] 0.0
          %351 = vst [vmem:[#allocation2 + $0x40] sm:$0xff] 0.0
          %352 = vst [vmem:[#allocation2 + $0x48] sm:$0xff] 0.0
          %353 = vst [vmem:[#allocation2 + $0x50] sm:$0xff] 0.0
          %354 = vst [vmem:[#allocation2 + $0x58] sm:$0xff] 0.0
          %355 = vst [vmem:[#allocation2 + $0x60] sm:$0xff] 0.0
          %356 = vst [vmem:[#allocation2 + $0x68] sm:$0xff] 0.0
          %357 = vst [vmem:[#allocation2 + $0x70] sm:$0xff] 0.0
          %358 = vst [vmem:[#allocation2 + $0x78] sm:$0xff] 0.0
          %359 = vst [vmem:[#allocation2 + $0x80] sm:$0xff] 0.0
          %360 = vst [vmem:[#allocation2 + $0x88] sm:$0xff] 0.0
          %361 = vst [vmem:[#allocation2 + $0x90] sm:$0xff] 0.0
          %362 = vst [vmem:[#allocation2 + $0x98] sm:$0xff] 0.0
          %363 = vst [vmem:[#allocation2 + $0xa0] sm:$0xff] 0.0
          %364 = vst [vmem:[#allocation2 + $0xa8] sm:$0xff] 0.0
          %365 = vst [vmem:[#allocation2 + $0xb0] sm:$0xff] 0.0
          %366 = vst [vmem:[#allocation2 + $0xb8] sm:$0xff] 0.0
          %367 = vst [vmem:[#allocation2 + $0xc0] sm:$0xff] 0.0
          %368 = vst [vmem:[#allocation2 + $0xc8] sm:$0xff] 0.0
          %369 = vst [vmem:[#allocation2 + $0xd0] sm:$0xff] 0.0
          %370 = vst [vmem:[#allocation2 + $0xd8] sm:$0xff] 0.0
          %371 = vst [vmem:[#allocation2 + $0xe0] sm:$0xff] 0.0
          %372 = vst [vmem:[#allocation2 + $0xe8] sm:$0xff] 0.0
          %373 = vst [vmem:[#allocation2 + $0xf0] sm:$0xff] 0.0
          %374 = vst [vmem:[#allocation2 + $0xf8] sm:$0xff] 0.0
        $region52: #{cpm_ffn.1} parent=35 // pred_fallthru
          _
        %v375 = vld [vmem:[%s327] sm:$0xff]
        %v376 = vld [vmem:[%s327 + $0x8] sm:$0xff]
        %v377 = vld [vmem:[%s327 + $0x10] sm:$0xff]
        %v378 = vld [vmem:[%s327 + $0x18] sm:$0xff]
        %v379 = vld [vmem:[%s327 + $0x20] sm:$0xff]
        %v380 = vld [vmem:[%s327 + $0x28] sm:$0xff]
        %v381 = vld [vmem:[%s327 + $0x30] sm:$0xff]
        %v382 = vld [vmem:[%s327 + $0x38] sm:$0xff]
        %v383 = vld [vmem:[%s327 + $0x40] sm:$0xff]
        %v384 = vld [vmem:[%s327 + $0x48] sm:$0xff]
        %v385 = vld [vmem:[%s327 + $0x50] sm:$0xff]
        %v386 = vld [vmem:[%s327 + $0x58] sm:$0xff]
        %v387 = vld [vmem:[%s327 + $0x60] sm:$0xff]
        %v388 = vld [vmem:[%s327 + $0x68] sm:$0xff]
        %v389 = vld [vmem:[%s327 + $0x70] sm:$0xff]
        %v390 = vld [vmem:[%s327 + $0x78] sm:$0xff]
        %v391 = vld [vmem:[%s327 + $0x80] sm:$0xff]
        %v392 = vld [vmem:[%s327 + $0x88] sm:$0xff]
        %v393 = vld [vmem:[%s327 + $0x90] sm:$0xff]
        %v394 = vld [vmem:[%s327 + $0x98] sm:$0xff]
        %v395 = vld [vmem:[%s327 + $0xa0] sm:$0xff]
        %v396 = vld [vmem:[%s327 + $0xa8] sm:$0xff]
        %v397 = vld [vmem:[%s327 + $0xb0] sm:$0xff]
        %v398 = vld [vmem:[%s327 + $0xb8] sm:$0xff]
        %v399 = vld [vmem:[%s327 + $0xc0] sm:$0xff]
        %v400 = vld [vmem:[%s327 + $0xc8] sm:$0xff]
        %v401 = vld [vmem:[%s327 + $0xd0] sm:$0xff]
        %v402 = vld [vmem:[%s327 + $0xd8] sm:$0xff]
        %v403 = vld [vmem:[%s327 + $0xe0] sm:$0xff]
        %v404 = vld [vmem:[%s327 + $0xe8] sm:$0xff]
        %v405 = vld [vmem:[%s327 + $0xf0] sm:$0xff]
        %v406 = vld [vmem:[%s327 + $0xf8] sm:$0xff]
        %v407 = vld [vmem:[%s262] sm:$0xff]
        %v408 = vld [vmem:[%s262 + $0x8] sm:$0xff]
        %v409 = vld [vmem:[%s262 + $0x10] sm:$0xff]
        %v410 = vld [vmem:[%s262 + $0x18] sm:$0xff]
        %v411 = vld [vmem:[%s262 + $0x20] sm:$0xff]
        %v412 = vld [vmem:[%s262 + $0x28] sm:$0xff]
        %v413 = vld [vmem:[%s262 + $0x30] sm:$0xff]
        %v414 = vld [vmem:[%s262 + $0x38] sm:$0xff]
        %v415 = vld [vmem:[%s262 + $0x40] sm:$0xff]
        %v416 = vld [vmem:[%s262 + $0x48] sm:$0xff]
        %v417 = vld [vmem:[%s262 + $0x50] sm:$0xff]
        %v418 = vld [vmem:[%s262 + $0x58] sm:$0xff]
        %v419 = vld [vmem:[%s262 + $0x60] sm:$0xff]
        %v420 = vld [vmem:[%s262 + $0x68] sm:$0xff]
        %v421 = vld [vmem:[%s262 + $0x70] sm:$0xff]
        %v422 = vld [vmem:[%s262 + $0x78] sm:$0xff]
        %v423 = vld [vmem:[%s262 + $0x80] sm:$0xff]
        %v424 = vld [vmem:[%s262 + $0x88] sm:$0xff]
        %v425 = vld [vmem:[%s262 + $0x90] sm:$0xff]
        %v426 = vld [vmem:[%s262 + $0x98] sm:$0xff]
        %v427 = vld [vmem:[%s262 + $0xa0] sm:$0xff]
        %v428 = vld [vmem:[%s262 + $0xa8] sm:$0xff]
        %v429 = vld [vmem:[%s262 + $0xb0] sm:$0xff]
        %v430 = vld [vmem:[%s262 + $0xb8] sm:$0xff]
        %v431 = vld [vmem:[%s262 + $0xc0] sm:$0xff]
        %v432 = vld [vmem:[%s262 + $0xc8] sm:$0xff]
        %v433 = vld [vmem:[%s262 + $0xd0] sm:$0xff]
        %v434 = vld [vmem:[%s262 + $0xd8] sm:$0xff]
        %v435 = vld [vmem:[%s262 + $0xe0] sm:$0xff]
        %v436 = vld [vmem:[%s262 + $0xe8] sm:$0xff]
        %v437 = vld [vmem:[%s262 + $0xf0] sm:$0xff]
        %v438 = vld [vmem:[%s262 + $0xf8] sm:$0xff]
        %v439 = vld [vmem:[%s262 + $0x100] sm:$0xff]
        %v440 = vld [vmem:[%s262 + $0x108] sm:$0xff]
        %v441 = vld [vmem:[%s262 + $0x110] sm:$0xff]
        %v442 = vld [vmem:[%s262 + $0x118] sm:$0xff]
        %v443 = vld [vmem:[%s262 + $0x120] sm:$0xff]
        %v444 = vld [vmem:[%s262 + $0x128] sm:$0xff]
        %v445 = vld [vmem:[%s262 + $0x130] sm:$0xff]
        %v446 = vld [vmem:[%s262 + $0x138] sm:$0xff]
        %v447 = vld [vmem:[%s262 + $0x140] sm:$0xff]
        %v448 = vld [vmem:[%s262 + $0x148] sm:$0xff]
        %v449 = vld [vmem:[%s262 + $0x150] sm:$0xff]
        %v450 = vld [vmem:[%s262 + $0x158] sm:$0xff]
        %v451 = vld [vmem:[%s262 + $0x160] sm:$0xff]
        %v452 = vld [vmem:[%s262 + $0x168] sm:$0xff]
        %v453 = vld [vmem:[%s262 + $0x170] sm:$0xff]
        %v454 = vld [vmem:[%s262 + $0x178] sm:$0xff]
        %v455 = vld [vmem:[%s262 + $0x180] sm:$0xff]
        %v456 = vld [vmem:[%s262 + $0x188] sm:$0xff]
        %v457 = vld [vmem:[%s262 + $0x190] sm:$0xff]
        %v458 = vld [vmem:[%s262 + $0x198] sm:$0xff]
        %v459 = vld [vmem:[%s262 + $0x1a0] sm:$0xff]
        %v460 = vld [vmem:[%s262 + $0x1a8] sm:$0xff]
        %v461 = vld [vmem:[%s262 + $0x1b0] sm:$0xff]
        %v462 = vld [vmem:[%s262 + $0x1b8] sm:$0xff]
        %v463 = vld [vmem:[%s262 + $0x1c0] sm:$0xff]
        %v464 = vld [vmem:[%s262 + $0x1c8] sm:$0xff]
        %v465 = vld [vmem:[%s262 + $0x1d0] sm:$0xff]
        %v466 = vld [vmem:[%s262 + $0x1d8] sm:$0xff]
        %v467 = vld [vmem:[%s262 + $0x1e0] sm:$0xff]
        %v468 = vld [vmem:[%s262 + $0x1e8] sm:$0xff]
        %v469 = vld [vmem:[%s262 + $0x1f0] sm:$0xff]
        %v470 = vld [vmem:[%s262 + $0x1f8] sm:$0xff]
        %471 = vmatprep.subr.mxu0 %v438
        %472 = vmatpush1.msra.mxu0 %v437
        %473 = vmatprep.subr.mxu0 %v436
        %474 = vmatpush1.msra.mxu0 %v435
        %475 = vmatprep.subr.mxu0 %v434
        %476 = vmatpush1.msra.mxu0 %v433
        %477 = vmatprep.subr.mxu0 %v432
        %478 = vmatpush1.msra.mxu0 %v431
        %479 = vmatprep.subr.mxu0 %v430
        %480 = vmatpush1.msra.mxu0 %v429
        %481 = vmatprep.subr.mxu0 %v428
        %482 = vmatpush1.msra.mxu0 %v427
        %483 = vmatprep.subr.mxu0 %v426
        %484 = vmatpush1.msra.mxu0 %v425
        %485 = vmatprep.subr.mxu0 %v424
        %486 = vmatpush1.msra.mxu0 %v423
        %487 = vmatprep.subr.mxu0 %v422
        %488 = vmatpush1.msra.mxu0 %v421
        %489 = vmatprep.subr.mxu0 %v420
        %490 = vmatpush1.msra.mxu0 %v419
        %491 = vmatprep.subr.mxu0 %v418
        %492 = vmatpush1.msra.mxu0 %v417
        %493 = vmatprep.subr.mxu0 %v416
        %494 = vmatpush1.msra.mxu0 %v415
        %495 = vmatprep.subr.mxu0 %v414
        %496 = vmatpush1.msra.mxu0 %v413
        %497 = vmatprep.subr.mxu0 %v412
        %498 = vmatpush1.msra.mxu0 %v411
        %499 = vmatprep.subr.mxu0 %v410
        %500 = vmatpush1.msra.mxu0 %v409
        %501 = vmatprep.subr.mxu0 %v408
        %502 = vmatpush1.msra.mxu0 %v407
        %503 = vmatprep.subr.mxu0 %v470
        %504 = vmatpush2.msra.mxu0 %v469
        %505 = vmatprep.subr.mxu0 %v468
        %506 = vmatpush2.msra.mxu0 %v467
        %507 = vmatprep.subr.mxu0 %v466
        %508 = vmatpush2.msra.mxu0 %v465
        %509 = vmatprep.subr.mxu0 %v464
        %510 = vmatpush2.msra.mxu0 %v463
        %511 = vmatprep.subr.mxu0 %v462
        %512 = vmatpush2.msra.mxu0 %v461
        %513 = vmatprep.subr.mxu0 %v460
        %514 = vmatpush2.msra.mxu0 %v459
        %515 = vmatprep.subr.mxu0 %v458
        %516 = vmatpush2.msra.mxu0 %v457
        %517 = vmatprep.subr.mxu0 %v456
        %518 = vmatpush2.msra.mxu0 %v455
        %519 = vmatprep.subr.mxu0 %v454
        %520 = vmatpush2.msra.mxu0 %v453
        %521 = vmatprep.subr.mxu0 %v452
        %522 = vmatpush2.msra.mxu0 %v451
        %523 = vmatprep.subr.mxu0 %v450
        %524 = vmatpush2.msra.mxu0 %v449
        %525 = vmatprep.subr.mxu0 %v448
        %526 = vmatpush2.msra.mxu0 %v447
        %527 = vmatprep.subr.mxu0 %v446
        %528 = vmatpush2.msra.mxu0 %v445
        %529 = vmatprep.subr.mxu0 %v444
        %530 = vmatpush2.msra.mxu0 %v443
        %531 = vmatprep.subr.mxu0 %v442
        %532 = vmatpush2.msra.mxu0 %v441
        %533 = vmatprep.subr.mxu0 %v440
        %534 = vmatpush2.msra.mxu0 %v439
        %535 = vmatprep.mubr.f32.mxu0 %v376
        %536 = vmatmul.mubr.f32.gmra.mxu0 %v375
        %v537 = vpop.f32.mrf.mxu0
        %v538 = vadd.f32 0.0, %v537
        %v539 = vpop.f32.mrf.mxu0
        %v540 = vadd.f32 0.0, %v539
        %541 = vmatprep.mubr.f32.mxu0 %v378
        %542 = vmatmul.mubr.f32.gmra.mxu0 %v377
        %v543 = vpop.f32.mrf.mxu0
        %v544 = vadd.f32 0.0, %v543
        %v545 = vpop.f32.mrf.mxu0
        %v546 = vadd.f32 0.0, %v545
        %547 = vmatprep.mubr.f32.mxu0 %v380
        %548 = vmatmul.mubr.f32.gmra.mxu0 %v379
        %v549 = vpop.f32.mrf.mxu0
        %v550 = vadd.f32 0.0, %v549
        %v551 = vpop.f32.mrf.mxu0
        %v552 = vadd.f32 0.0, %v551
        %553 = vmatprep.mubr.f32.mxu0 %v382
        %554 = vmatmul.mubr.f32.gmra.mxu0 %v381
        %v555 = vpop.f32.mrf.mxu0
        %v556 = vadd.f32 0.0, %v555
        %v557 = vpop.f32.mrf.mxu0
        %v558 = vadd.f32 0.0, %v557
        %559 = vmatprep.mubr.f32.mxu0 %v384
        %560 = vmatmul.mubr.f32.gmra.mxu0 %v383
        %v561 = vpop.f32.mrf.mxu0
        %v562 = vadd.f32 0.0, %v561
        %v563 = vpop.f32.mrf.mxu0
        %v564 = vadd.f32 0.0, %v563
        %565 = vmatprep.mubr.f32.mxu0 %v386
        %566 = vmatmul.mubr.f32.gmra.mxu0 %v385
        %v567 = vpop.f32.mrf.mxu0
        %v568 = vadd.f32 0.0, %v567
        %v569 = vpop.f32.mrf.mxu0
        %v570 = vadd.f32 0.0, %v569
        %571 = vmatprep.mubr.f32.mxu0 %v388
        %572 = vmatmul.mubr.f32.gmra.mxu0 %v387
        %v573 = vpop.f32.mrf.mxu0
        %v574 = vadd.f32 0.0, %v573
        %v575 = vpop.f32.mrf.mxu0
        %v576 = vadd.f32 0.0, %v575
        %577 = vmatprep.mubr.f32.mxu0 %v390
        %578 = vmatmul.mubr.f32.gmra.mxu0 %v389
        %v579 = vpop.f32.mrf.mxu0
        %v580 = vadd.f32 0.0, %v579
        %v581 = vpop.f32.mrf.mxu0
        %v582 = vadd.f32 0.0, %v581
        %583 = vmatprep.mubr.f32.mxu0 %v392
        %584 = vmatmul.mubr.f32.gmra.mxu0 %v391
        %v585 = vpop.f32.mrf.mxu0
        %v586 = vadd.f32 0.0, %v585
        %v587 = vpop.f32.mrf.mxu0
        %v588 = vadd.f32 0.0, %v587
        %589 = vmatprep.mubr.f32.mxu0 %v394
        %590 = vmatmul.mubr.f32.gmra.mxu0 %v393
        %v591 = vpop.f32.mrf.mxu0
        %v592 = vadd.f32 0.0, %v591
        %v593 = vpop.f32.mrf.mxu0
        %v594 = vadd.f32 0.0, %v593
        %595 = vmatprep.mubr.f32.mxu0 %v396
        %596 = vmatmul.mubr.f32.gmra.mxu0 %v395
        %v597 = vpop.f32.mrf.mxu0
        %v598 = vadd.f32 0.0, %v597
        %v599 = vpop.f32.mrf.mxu0
        %v600 = vadd.f32 0.0, %v599
        %601 = vmatprep.mubr.f32.mxu0 %v398
        %602 = vmatmul.mubr.f32.gmra.mxu0 %v397
        %v603 = vpop.f32.mrf.mxu0
        %v604 = vadd.f32 0.0, %v603
        %v605 = vpop.f32.mrf.mxu0
        %v606 = vadd.f32 0.0, %v605
        %607 = vmatprep.mubr.f32.mxu0 %v400
        %608 = vmatmul.mubr.f32.gmra.mxu0 %v399
        %v609 = vpop.f32.mrf.mxu0
        %v610 = vadd.f32 0.0, %v609
        %v611 = vpop.f32.mrf.mxu0
        %v612 = vadd.f32 0.0, %v611
        %613 = vmatprep.mubr.f32.mxu0 %v402
        %614 = vmatmul.mubr.f32.gmra.mxu0 %v401
        %v615 = vpop.f32.mrf.mxu0
        %v616 = vadd.f32 0.0, %v615
        %v617 = vpop.f32.mrf.mxu0
        %v618 = vadd.f32 0.0, %v617
        %619 = vmatprep.mubr.f32.mxu0 %v404
        %620 = vmatmul.mubr.f32.gmra.mxu0 %v403
        %v621 = vpop.f32.mrf.mxu0
        %v622 = vadd.f32 0.0, %v621
        %v623 = vpop.f32.mrf.mxu0
        %v624 = vadd.f32 0.0, %v623
        %625 = vmatprep.mubr.f32.mxu0 %v406
        %626 = vmatmul.mubr.f32.gmra.mxu0 %v405
        %v627 = vpop.f32.mrf.mxu0
        %v628 = vadd.f32 0.0, %v627
        %v629 = vpop.f32.mrf.mxu0
        %v630 = vadd.f32 0.0, %v629
        %631 = vdwg.mxu0
        %v632 = vld [vmem:[%s271] sm:$0xff]
        %v633 = vld [vmem:[%s271 + $0x8] sm:$0xff]
        %v634 = vld [vmem:[%s271 + $0x10] sm:$0xff]
        %v635 = vld [vmem:[%s271 + $0x18] sm:$0xff]
        %v636 = vld [vmem:[%s271 + $0x20] sm:$0xff]
        %v637 = vld [vmem:[%s271 + $0x28] sm:$0xff]
        %v638 = vld [vmem:[%s271 + $0x30] sm:$0xff]
        %v639 = vld [vmem:[%s271 + $0x38] sm:$0xff]
        %v640 = vld [vmem:[%s271 + $0x40] sm:$0xff]
        %v641 = vld [vmem:[%s271 + $0x48] sm:$0xff]
        %v642 = vld [vmem:[%s271 + $0x50] sm:$0xff]
        %v643 = vld [vmem:[%s271 + $0x58] sm:$0xff]
        %v644 = vld [vmem:[%s271 + $0x60] sm:$0xff]
        %v645 = vld [vmem:[%s271 + $0x68] sm:$0xff]
        %v646 = vld [vmem:[%s271 + $0x70] sm:$0xff]
        %v647 = vld [vmem:[%s271 + $0x78] sm:$0xff]
        %v648 = vld [vmem:[%s271 + $0x80] sm:$0xff]
        %v649 = vld [vmem:[%s271 + $0x88] sm:$0xff]
        %v650 = vld [vmem:[%s271 + $0x90] sm:$0xff]
        %v651 = vld [vmem:[%s271 + $0x98] sm:$0xff]
        %v652 = vld [vmem:[%s271 + $0xa0] sm:$0xff]
        %v653 = vld [vmem:[%s271 + $0xa8] sm:$0xff]
        %v654 = vld [vmem:[%s271 + $0xb0] sm:$0xff]
        %v655 = vld [vmem:[%s271 + $0xb8] sm:$0xff]
        %v656 = vld [vmem:[%s271 + $0xc0] sm:$0xff]
        %v657 = vld [vmem:[%s271 + $0xc8] sm:$0xff]
        %v658 = vld [vmem:[%s271 + $0xd0] sm:$0xff]
        %v659 = vld [vmem:[%s271 + $0xd8] sm:$0xff]
        %v660 = vld [vmem:[%s271 + $0xe0] sm:$0xff]
        %v661 = vld [vmem:[%s271 + $0xe8] sm:$0xff]
        %v662 = vld [vmem:[%s271 + $0xf0] sm:$0xff]
        %v663 = vld [vmem:[%s271 + $0xf8] sm:$0xff]
        %v664 = vld [vmem:[%s271 + $0x100] sm:$0xff]
        %v665 = vld [vmem:[%s271 + $0x108] sm:$0xff]
        %v666 = vld [vmem:[%s271 + $0x110] sm:$0xff]
        %v667 = vld [vmem:[%s271 + $0x118] sm:$0xff]
        %v668 = vld [vmem:[%s271 + $0x120] sm:$0xff]
        %v669 = vld [vmem:[%s271 + $0x128] sm:$0xff]
        %v670 = vld [vmem:[%s271 + $0x130] sm:$0xff]
        %v671 = vld [vmem:[%s271 + $0x138] sm:$0xff]
        %v672 = vld [vmem:[%s271 + $0x140] sm:$0xff]
        %v673 = vld [vmem:[%s271 + $0x148] sm:$0xff]
        %v674 = vld [vmem:[%s271 + $0x150] sm:$0xff]
        %v675 = vld [vmem:[%s271 + $0x158] sm:$0xff]
        %v676 = vld [vmem:[%s271 + $0x160] sm:$0xff]
        %v677 = vld [vmem:[%s271 + $0x168] sm:$0xff]
        %v678 = vld [vmem:[%s271 + $0x170] sm:$0xff]
        %v679 = vld [vmem:[%s271 + $0x178] sm:$0xff]
        %v680 = vld [vmem:[%s271 + $0x180] sm:$0xff]
        %v681 = vld [vmem:[%s271 + $0x188] sm:$0xff]
        %v682 = vld [vmem:[%s271 + $0x190] sm:$0xff]
        %v683 = vld [vmem:[%s271 + $0x198] sm:$0xff]
        %v684 = vld [vmem:[%s271 + $0x1a0] sm:$0xff]
        %v685 = vld [vmem:[%s271 + $0x1a8] sm:$0xff]
        %v686 = vld [vmem:[%s271 + $0x1b0] sm:$0xff]
        %v687 = vld [vmem:[%s271 + $0x1b8] sm:$0xff]
        %v688 = vld [vmem:[%s271 + $0x1c0] sm:$0xff]
        %v689 = vld [vmem:[%s271 + $0x1c8] sm:$0xff]
        %v690 = vld [vmem:[%s271 + $0x1d0] sm:$0xff]
        %v691 = vld [vmem:[%s271 + $0x1d8] sm:$0xff]
        %v692 = vld [vmem:[%s271 + $0x1e0] sm:$0xff]
        %v693 = vld [vmem:[%s271 + $0x1e8] sm:$0xff]
        %v694 = vld [vmem:[%s271 + $0x1f0] sm:$0xff]
        %v695 = vld [vmem:[%s271 + $0x1f8] sm:$0xff]
        %696 = vmatprep.subr.mxu0 %v663
        %697 = vmatpush1.msra.mxu0 %v662
        %698 = vmatprep.subr.mxu0 %v661
        %699 = vmatpush1.msra.mxu0 %v660
        %700 = vmatprep.subr.mxu0 %v659
        %701 = vmatpush1.msra.mxu0 %v658
        %702 = vmatprep.subr.mxu0 %v657
        %703 = vmatpush1.msra.mxu0 %v656
        %704 = vmatprep.subr.mxu0 %v655
        %705 = vmatpush1.msra.mxu0 %v654
        %706 = vmatprep.subr.mxu0 %v653
        %707 = vmatpush1.msra.mxu0 %v652
        %708 = vmatprep.subr.mxu0 %v651
        %709 = vmatpush1.msra.mxu0 %v650
        %710 = vmatprep.subr.mxu0 %v649
        %711 = vmatpush1.msra.mxu0 %v648
        %712 = vmatprep.subr.mxu0 %v647
        %713 = vmatpush1.msra.mxu0 %v646
        %714 = vmatprep.subr.mxu0 %v645
        %715 = vmatpush1.msra.mxu0 %v644
        %716 = vmatprep.subr.mxu0 %v643
        %717 = vmatpush1.msra.mxu0 %v642
        %718 = vmatprep.subr.mxu0 %v641
        %719 = vmatpush1.msra.mxu0 %v640
        %720 = vmatprep.subr.mxu0 %v639
        %721 = vmatpush1.msra.mxu0 %v638
        %722 = vmatprep.subr.mxu0 %v637
        %723 = vmatpush1.msra.mxu0 %v636
        %724 = vmatprep.subr.mxu0 %v635
        %725 = vmatpush1.msra.mxu0 %v634
        %726 = vmatprep.subr.mxu0 %v633
        %727 = vmatpush1.msra.mxu0 %v632
        %728 = vmatprep.subr.mxu0 %v695
        %729 = vmatpush2.msra.mxu0 %v694
        %730 = vmatprep.subr.mxu0 %v693
        %731 = vmatpush2.msra.mxu0 %v692
        %732 = vmatprep.subr.mxu0 %v691
        %733 = vmatpush2.msra.mxu0 %v690
        %734 = vmatprep.subr.mxu0 %v689
        %735 = vmatpush2.msra.mxu0 %v688
        %736 = vmatprep.subr.mxu0 %v687
        %737 = vmatpush2.msra.mxu0 %v686
        %738 = vmatprep.subr.mxu0 %v685
        %739 = vmatpush2.msra.mxu0 %v684
        %740 = vmatprep.subr.mxu0 %v683
        %741 = vmatpush2.msra.mxu0 %v682
        %742 = vmatprep.subr.mxu0 %v681
        %743 = vmatpush2.msra.mxu0 %v680
        %744 = vmatprep.subr.mxu0 %v679
        %745 = vmatpush2.msra.mxu0 %v678
        %746 = vmatprep.subr.mxu0 %v677
        %747 = vmatpush2.msra.mxu0 %v676
        %748 = vmatprep.subr.mxu0 %v675
        %749 = vmatpush2.msra.mxu0 %v674
        %750 = vmatprep.subr.mxu0 %v673
        %751 = vmatpush2.msra.mxu0 %v672
        %752 = vmatprep.subr.mxu0 %v671
        %753 = vmatpush2.msra.mxu0 %v670
        %754 = vmatprep.subr.mxu0 %v669
        %755 = vmatpush2.msra.mxu0 %v668
        %756 = vmatprep.subr.mxu0 %v667
        %757 = vmatpush2.msra.mxu0 %v666
        %758 = vmatprep.subr.mxu0 %v665
        %759 = vmatpush2.msra.mxu0 %v664
        %760 = vmatprep.mubr.f32.mxu0 %v376
        %761 = vmatmul.mubr.f32.gmra.mxu0 %v375
        %v762 = vpop.f32.mrf.mxu0
        %v763 = vadd.f32 0.0, %v762
        %v764 = vpop.f32.mrf.mxu0
        %v765 = vadd.f32 0.0, %v764
        %766 = vmatprep.mubr.f32.mxu0 %v378
        %767 = vmatmul.mubr.f32.gmra.mxu0 %v377
        %v768 = vpop.f32.mrf.mxu0
        %v769 = vadd.f32 0.0, %v768
        %v770 = vpop.f32.mrf.mxu0
        %v771 = vadd.f32 0.0, %v770
        %772 = vmatprep.mubr.f32.mxu0 %v380
        %773 = vmatmul.mubr.f32.gmra.mxu0 %v379
        %v774 = vpop.f32.mrf.mxu0
        %v775 = vadd.f32 0.0, %v774
        %v776 = vpop.f32.mrf.mxu0
        %v777 = vadd.f32 0.0, %v776
        %778 = vmatprep.mubr.f32.mxu0 %v382
        %779 = vmatmul.mubr.f32.gmra.mxu0 %v381
        %v780 = vpop.f32.mrf.mxu0
        %v781 = vadd.f32 0.0, %v780
        %v782 = vpop.f32.mrf.mxu0
        %v783 = vadd.f32 0.0, %v782
        %784 = vmatprep.mubr.f32.mxu0 %v384
        %785 = vmatmul.mubr.f32.gmra.mxu0 %v383
        %v786 = vpop.f32.mrf.mxu0
        %v787 = vadd.f32 0.0, %v786
        %v788 = vpop.f32.mrf.mxu0
        %v789 = vadd.f32 0.0, %v788
        %790 = vmatprep.mubr.f32.mxu0 %v386
        %791 = vmatmul.mubr.f32.gmra.mxu0 %v385
        %v792 = vpop.f32.mrf.mxu0
        %v793 = vadd.f32 0.0, %v792
        %v794 = vpop.f32.mrf.mxu0
        %v795 = vadd.f32 0.0, %v794
        %796 = vmatprep.mubr.f32.mxu0 %v388
        %797 = vmatmul.mubr.f32.gmra.mxu0 %v387
        %v798 = vpop.f32.mrf.mxu0
        %v799 = vadd.f32 0.0, %v798
        %v800 = vpop.f32.mrf.mxu0
        %v801 = vadd.f32 0.0, %v800
        %802 = vmatprep.mubr.f32.mxu0 %v390
        %803 = vmatmul.mubr.f32.gmra.mxu0 %v389
        %v804 = vpop.f32.mrf.mxu0
        %v805 = vadd.f32 0.0, %v804
        %v806 = vpop.f32.mrf.mxu0
        %v807 = vadd.f32 0.0, %v806
        %808 = vmatprep.mubr.f32.mxu0 %v392
        %809 = vmatmul.mubr.f32.gmra.mxu0 %v391
        %v810 = vpop.f32.mrf.mxu0
        %v811 = vadd.f32 0.0, %v810
        %v812 = vpop.f32.mrf.mxu0
        %v813 = vadd.f32 0.0, %v812
        %814 = vmatprep.mubr.f32.mxu0 %v394
        %815 = vmatmul.mubr.f32.gmra.mxu0 %v393
        %v816 = vpop.f32.mrf.mxu0
        %v817 = vadd.f32 0.0, %v816
        %v818 = vpop.f32.mrf.mxu0
        %v819 = vadd.f32 0.0, %v818
        %820 = vmatprep.mubr.f32.mxu0 %v396
        %821 = vmatmul.mubr.f32.gmra.mxu0 %v395
        %v822 = vpop.f32.mrf.mxu0
        %v823 = vadd.f32 0.0, %v822
        %v824 = vpop.f32.mrf.mxu0
        %v825 = vadd.f32 0.0, %v824
        %826 = vmatprep.mubr.f32.mxu0 %v398
        %827 = vmatmul.mubr.f32.gmra.mxu0 %v397
        %v828 = vpop.f32.mrf.mxu0
        %v829 = vadd.f32 0.0, %v828
        %v830 = vpop.f32.mrf.mxu0
        %v831 = vadd.f32 0.0, %v830
        %832 = vmatprep.mubr.f32.mxu0 %v400
        %833 = vmatmul.mubr.f32.gmra.mxu0 %v399
        %v834 = vpop.f32.mrf.mxu0
        %v835 = vadd.f32 0.0, %v834
        %v836 = vpop.f32.mrf.mxu0
        %v837 = vadd.f32 0.0, %v836
        %838 = vmatprep.mubr.f32.mxu0 %v402
        %839 = vmatmul.mubr.f32.gmra.mxu0 %v401
        %v840 = vpop.f32.mrf.mxu0
        %v841 = vadd.f32 0.0, %v840
        %v842 = vpop.f32.mrf.mxu0
        %v843 = vadd.f32 0.0, %v842
        %844 = vmatprep.mubr.f32.mxu0 %v404
        %845 = vmatmul.mubr.f32.gmra.mxu0 %v403
        %v846 = vpop.f32.mrf.mxu0
        %v847 = vadd.f32 0.0, %v846
        %v848 = vpop.f32.mrf.mxu0
        %v849 = vadd.f32 0.0, %v848
        %850 = vmatprep.mubr.f32.mxu0 %v406
        %851 = vmatmul.mubr.f32.gmra.mxu0 %v405
        %v852 = vpop.f32.mrf.mxu0
        %v853 = vadd.f32 0.0, %v852
        %v854 = vpop.f32.mrf.mxu0
        %v855 = vadd.f32 0.0, %v854
        %856 = vdwg.mxu0
        %v857 = vxor.u32 %v538, 2147483648
        %v858 = vxor.u32 %v540, 2147483648
        %v859 = vxor.u32 %v544, 2147483648
        %v860 = vxor.u32 %v546, 2147483648
        %v861 = vxor.u32 %v550, 2147483648
        %v862 = vxor.u32 %v552, 2147483648
        %v863 = vxor.u32 %v556, 2147483648
        %v864 = vxor.u32 %v558, 2147483648
        %v865 = vxor.u32 %v562, 2147483648
        %v866 = vxor.u32 %v564, 2147483648
        %v867 = vxor.u32 %v568, 2147483648
        %v868 = vxor.u32 %v570, 2147483648
        %v869 = vxor.u32 %v574, 2147483648
        %v870 = vxor.u32 %v576, 2147483648
        %v871 = vxor.u32 %v580, 2147483648
        %v872 = vxor.u32 %v582, 2147483648
        %v873 = vxor.u32 %v586, 2147483648
        %v874 = vxor.u32 %v588, 2147483648
        %v875 = vxor.u32 %v592, 2147483648
        %v876 = vxor.u32 %v594, 2147483648
        %v877 = vxor.u32 %v598, 2147483648
        %v878 = vxor.u32 %v600, 2147483648
        %v879 = vxor.u32 %v604, 2147483648
        %v880 = vxor.u32 %v606, 2147483648
        %v881 = vxor.u32 %v610, 2147483648
        %v882 = vxor.u32 %v612, 2147483648
        %v883 = vxor.u32 %v616, 2147483648
        %v884 = vxor.u32 %v618, 2147483648
        %v885 = vxor.u32 %v622, 2147483648
        %v886 = vxor.u32 %v624, 2147483648
        %v887 = vxor.u32 %v628, 2147483648
        %v888 = vxor.u32 %v630, 2147483648
        %v889 = vmul.f32 %v857, 1.442695
        %v890 = vpow.pop %v889
        %v891 = vmul.f32 %v858, 1.442695
        %v892 = vpow.pop %v891
        %v893 = vmul.f32 %v859, 1.442695
        %v894 = vpow.pop %v893
        %v895 = vmul.f32 %v860, 1.442695
        %v896 = vpow.pop %v895
        %v897 = vmul.f32 %v861, 1.442695
        %v898 = vpow.pop %v897
        %v899 = vmul.f32 %v862, 1.442695
        %v900 = vpow.pop %v899
        %v901 = vmul.f32 %v863, 1.442695
        %v902 = vpow.pop %v901
        %v903 = vmul.f32 %v864, 1.442695
        %v904 = vpow.pop %v903
        %v905 = vmul.f32 %v865, 1.442695
        %v906 = vpow.pop %v905
        %v907 = vmul.f32 %v866, 1.442695
        %v908 = vpow.pop %v907
        %v909 = vmul.f32 %v867, 1.442695
        %v910 = vpow.pop %v909
        %v911 = vmul.f32 %v868, 1.442695
        %v912 = vpow.pop %v911
        %v913 = vmul.f32 %v869, 1.442695
        %v914 = vpow.pop %v913
        %v915 = vmul.f32 %v870, 1.442695
        %v916 = vpow.pop %v915
        %v917 = vmul.f32 %v871, 1.442695
        %v918 = vpow.pop %v917
        %v919 = vmul.f32 %v872, 1.442695
        %v920 = vpow.pop %v919
        %v921 = vmul.f32 %v873, 1.442695
        %v922 = vpow.pop %v921
        %v923 = vmul.f32 %v874, 1.442695
        %v924 = vpow.pop %v923
        %v925 = vmul.f32 %v875, 1.442695
        %v926 = vpow.pop %v925
        %v927 = vmul.f32 %v876, 1.442695
        %v928 = vpow.pop %v927
        %v929 = vmul.f32 %v877, 1.442695
        %v930 = vpow.pop %v929
        %v931 = vmul.f32 %v878, 1.442695
        %v932 = vpow.pop %v931
        %v933 = vmul.f32 %v879, 1.442695
        %v934 = vpow.pop %v933
        %v935 = vmul.f32 %v880, 1.442695
        %v936 = vpow.pop %v935
        %v937 = vmul.f32 %v881, 1.442695
        %v938 = vpow.pop %v937
        %v939 = vmul.f32 %v882, 1.442695
        %v940 = vpow.pop %v939
        %v941 = vmul.f32 %v883, 1.442695
        %v942 = vpow.pop %v941
        %v943 = vmul.f32 %v884, 1.442695
        %v944 = vpow.pop %v943
        %v945 = vmul.f32 %v885, 1.442695
        %v946 = vpow.pop %v945
        %v947 = vmul.f32 %v886, 1.442695
        %v948 = vpow.pop %v947
        %v949 = vmul.f32 %v887, 1.442695
        %v950 = vpow.pop %v949
        %v951 = vmul.f32 %v888, 1.442695
        %v952 = vpow.pop %v951
        %v953 = vadd.f32 %v890, 1.0
        %v954 = vadd.f32 %v892, 1.0
        %v955 = vadd.f32 %v894, 1.0
        %v956 = vadd.f32 %v896, 1.0
        %v957 = vadd.f32 %v898, 1.0
        %v958 = vadd.f32 %v900, 1.0
        %v959 = vadd.f32 %v902, 1.0
        %v960 = vadd.f32 %v904, 1.0
        %v961 = vadd.f32 %v906, 1.0
        %v962 = vadd.f32 %v908, 1.0
        %v963 = vadd.f32 %v910, 1.0
        %v964 = vadd.f32 %v912, 1.0
        %v965 = vadd.f32 %v914, 1.0
        %v966 = vadd.f32 %v916, 1.0
        %v967 = vadd.f32 %v918, 1.0
        %v968 = vadd.f32 %v920, 1.0
        %v969 = vadd.f32 %v922, 1.0
        %v970 = vadd.f32 %v924, 1.0
        %v971 = vadd.f32 %v926, 1.0
        %v972 = vadd.f32 %v928, 1.0
        %v973 = vadd.f32 %v930, 1.0
        %v974 = vadd.f32 %v932, 1.0
        %v975 = vadd.f32 %v934, 1.0
        %v976 = vadd.f32 %v936, 1.0
        %v977 = vadd.f32 %v938, 1.0
        %v978 = vadd.f32 %v940, 1.0
        %v979 = vadd.f32 %v942, 1.0
        %v980 = vadd.f32 %v944, 1.0
        %v981 = vadd.f32 %v946, 1.0
        %v982 = vadd.f32 %v948, 1.0
        %v983 = vadd.f32 %v950, 1.0
        %v984 = vadd.f32 %v952, 1.0
        %v985 = vrcp.pop %v953
        %v986 = vmul.f32 1.0, %v985
        %v987 = vrcp.pop %v954
        %v988 = vmul.f32 1.0, %v987
        %v989 = vrcp.pop %v955
        %v990 = vmul.f32 1.0, %v989
        %v991 = vrcp.pop %v956
        %v992 = vmul.f32 1.0, %v991
        %v993 = vrcp.pop %v957
        %v994 = vmul.f32 1.0, %v993
        %v995 = vrcp.pop %v958
        %v996 = vmul.f32 1.0, %v995
        %v997 = vrcp.pop %v959
        %v998 = vmul.f32 1.0, %v997
        %v999 = vrcp.pop %v960
        %v1000 = vmul.f32 1.0, %v999
        %v1001 = vrcp.pop %v961
        %v1002 = vmul.f32 1.0, %v1001
        %v1003 = vrcp.pop %v962
        %v1004 = vmul.f32 1.0, %v1003
        %v1005 = vrcp.pop %v963
        %v1006 = vmul.f32 1.0, %v1005
        %v1007 = vrcp.pop %v964
        %v1008 = vmul.f32 1.0, %v1007
        %v1009 = vrcp.pop %v965
        %v1010 = vmul.f32 1.0, %v1009
        %v1011 = vrcp.pop %v966
        %v1012 = vmul.f32 1.0, %v1011
        %v1013 = vrcp.pop %v967
        %v1014 = vmul.f32 1.0, %v1013
        %v1015 = vrcp.pop %v968
        %v1016 = vmul.f32 1.0, %v1015
        %v1017 = vrcp.pop %v969
        %v1018 = vmul.f32 1.0, %v1017
        %v1019 = vrcp.pop %v970
        %v1020 = vmul.f32 1.0, %v1019
        %v1021 = vrcp.pop %v971
        %v1022 = vmul.f32 1.0, %v1021
        %v1023 = vrcp.pop %v972
        %v1024 = vmul.f32 1.0, %v1023
        %v1025 = vrcp.pop %v973
        %v1026 = vmul.f32 1.0, %v1025
        %v1027 = vrcp.pop %v974
        %v1028 = vmul.f32 1.0, %v1027
        %v1029 = vrcp.pop %v975
        %v1030 = vmul.f32 1.0, %v1029
        %v1031 = vrcp.pop %v976
        %v1032 = vmul.f32 1.0, %v1031
        %v1033 = vrcp.pop %v977
        %v1034 = vmul.f32 1.0, %v1033
        %v1035 = vrcp.pop %v978
        %v1036 = vmul.f32 1.0, %v1035
        %v1037 = vrcp.pop %v979
        %v1038 = vmul.f32 1.0, %v1037
        %v1039 = vrcp.pop %v980
        %v1040 = vmul.f32 1.0, %v1039
        %v1041 = vrcp.pop %v981
        %v1042 = vmul.f32 1.0, %v1041
        %v1043 = vrcp.pop %v982
        %v1044 = vmul.f32 1.0, %v1043
        %v1045 = vrcp.pop %v983
        %v1046 = vmul.f32 1.0, %v1045
        %v1047 = vrcp.pop %v984
        %v1048 = vmul.f32 1.0, %v1047
        %v1049 = vmul.f32 %v538, %v986
        %v1050 = vmul.f32 %v540, %v988
        %v1051 = vmul.f32 %v544, %v990
        %v1052 = vmul.f32 %v546, %v992
        %v1053 = vmul.f32 %v550, %v994
        %v1054 = vmul.f32 %v552, %v996
        %v1055 = vmul.f32 %v556, %v998
        %v1056 = vmul.f32 %v558, %v1000
        %v1057 = vmul.f32 %v562, %v1002
        %v1058 = vmul.f32 %v564, %v1004
        %v1059 = vmul.f32 %v568, %v1006
        %v1060 = vmul.f32 %v570, %v1008
        %v1061 = vmul.f32 %v574, %v1010
        %v1062 = vmul.f32 %v576, %v1012
        %v1063 = vmul.f32 %v580, %v1014
        %v1064 = vmul.f32 %v582, %v1016
        %v1065 = vmul.f32 %v586, %v1018
        %v1066 = vmul.f32 %v588, %v1020
        %v1067 = vmul.f32 %v592, %v1022
        %v1068 = vmul.f32 %v594, %v1024
        %v1069 = vmul.f32 %v598, %v1026
        %v1070 = vmul.f32 %v600, %v1028
        %v1071 = vmul.f32 %v604, %v1030
        %v1072 = vmul.f32 %v606, %v1032
        %v1073 = vmul.f32 %v610, %v1034
        %v1074 = vmul.f32 %v612, %v1036
        %v1075 = vmul.f32 %v616, %v1038
        %v1076 = vmul.f32 %v618, %v1040
        %v1077 = vmul.f32 %v622, %v1042
        %v1078 = vmul.f32 %v624, %v1044
        %v1079 = vmul.f32 %v628, %v1046
        %v1080 = vmul.f32 %v630, %v1048
        %v1081 = vmul.f32 %v1049, %v763
        %v1082 = vmul.f32 %v1050, %v765
        %v1083 = vmul.f32 %v1051, %v769
        %v1084 = vmul.f32 %v1052, %v771
        %v1085 = vmul.f32 %v1053, %v775
        %v1086 = vmul.f32 %v1054, %v777
        %v1087 = vmul.f32 %v1055, %v781
        %v1088 = vmul.f32 %v1056, %v783
        %v1089 = vmul.f32 %v1057, %v787
        %v1090 = vmul.f32 %v1058, %v789
        %v1091 = vmul.f32 %v1059, %v793
        %v1092 = vmul.f32 %v1060, %v795
        %v1093 = vmul.f32 %v1061, %v799
        %v1094 = vmul.f32 %v1062, %v801
        %v1095 = vmul.f32 %v1063, %v805
        %v1096 = vmul.f32 %v1064, %v807
        %v1097 = vmul.f32 %v1065, %v811
        %v1098 = vmul.f32 %v1066, %v813
        %v1099 = vmul.f32 %v1067, %v817
        %v1100 = vmul.f32 %v1068, %v819
        %v1101 = vmul.f32 %v1069, %v823
        %v1102 = vmul.f32 %v1070, %v825
        %v1103 = vmul.f32 %v1071, %v829
        %v1104 = vmul.f32 %v1072, %v831
        %v1105 = vmul.f32 %v1073, %v835
        %v1106 = vmul.f32 %v1074, %v837
        %v1107 = vmul.f32 %v1075, %v841
        %v1108 = vmul.f32 %v1076, %v843
        %v1109 = vmul.f32 %v1077, %v847
        %v1110 = vmul.f32 %v1078, %v849
        %v1111 = vmul.f32 %v1079, %v853
        %v1112 = vmul.f32 %v1080, %v855
        %v1113 = vld [vmem:[#allocation2] sm:$0xff]
        %v1114 = vld [vmem:[#allocation2 + $0x8] sm:$0xff]
        %v1115 = vld [vmem:[#allocation2 + $0x10] sm:$0xff]
        %v1116 = vld [vmem:[#allocation2 + $0x18] sm:$0xff]
        %v1117 = vld [vmem:[#allocation2 + $0x20] sm:$0xff]
        %v1118 = vld [vmem:[#allocation2 + $0x28] sm:$0xff]
        %v1119 = vld [vmem:[#allocation2 + $0x30] sm:$0xff]
        %v1120 = vld [vmem:[#allocation2 + $0x38] sm:$0xff]
        %v1121 = vld [vmem:[#allocation2 + $0x40] sm:$0xff]
        %v1122 = vld [vmem:[#allocation2 + $0x48] sm:$0xff]
        %v1123 = vld [vmem:[#allocation2 + $0x50] sm:$0xff]
        %v1124 = vld [vmem:[#allocation2 + $0x58] sm:$0xff]
        %v1125 = vld [vmem:[#allocation2 + $0x60] sm:$0xff]
        %v1126 = vld [vmem:[#allocation2 + $0x68] sm:$0xff]
        %v1127 = vld [vmem:[#allocation2 + $0x70] sm:$0xff]
        %v1128 = vld [vmem:[#allocation2 + $0x78] sm:$0xff]
        %v1129 = vld [vmem:[#allocation2 + $0x80] sm:$0xff]
        %v1130 = vld [vmem:[#allocation2 + $0x88] sm:$0xff]
        %v1131 = vld [vmem:[#allocation2 + $0x90] sm:$0xff]
        %v1132 = vld [vmem:[#allocation2 + $0x98] sm:$0xff]
        %v1133 = vld [vmem:[#allocation2 + $0xa0] sm:$0xff]
        %v1134 = vld [vmem:[#allocation2 + $0xa8] sm:$0xff]
        %v1135 = vld [vmem:[#allocation2 + $0xb0] sm:$0xff]
        %v1136 = vld [vmem:[#allocation2 + $0xb8] sm:$0xff]
        %v1137 = vld [vmem:[#allocation2 + $0xc0] sm:$0xff]
        %v1138 = vld [vmem:[#allocation2 + $0xc8] sm:$0xff]
        %v1139 = vld [vmem:[#allocation2 + $0xd0] sm:$0xff]
        %v1140 = vld [vmem:[#allocation2 + $0xd8] sm:$0xff]
        %v1141 = vld [vmem:[#allocation2 + $0xe0] sm:$0xff]
        %v1142 = vld [vmem:[#allocation2 + $0xe8] sm:$0xff]
        %v1143 = vld [vmem:[#allocation2 + $0xf0] sm:$0xff]
        %v1144 = vld [vmem:[#allocation2 + $0xf8] sm:$0xff]
        %v1145 = vld [vmem:[%s280] sm:$0xff]
        %v1146 = vld [vmem:[%s280 + $0x8] sm:$0xff]
        %v1147 = vld [vmem:[%s280 + $0x10] sm:$0xff]
        %v1148 = vld [vmem:[%s280 + $0x18] sm:$0xff]
        %v1149 = vld [vmem:[%s280 + $0x20] sm:$0xff]
        %v1150 = vld [vmem:[%s280 + $0x28] sm:$0xff]
        %v1151 = vld [vmem:[%s280 + $0x30] sm:$0xff]
        %v1152 = vld [vmem:[%s280 + $0x38] sm:$0xff]
        %v1153 = vld [vmem:[%s280 + $0x40] sm:$0xff]
        %v1154 = vld [vmem:[%s280 + $0x48] sm:$0xff]
        %v1155 = vld [vmem:[%s280 + $0x50] sm:$0xff]
        %v1156 = vld [vmem:[%s280 + $0x58] sm:$0xff]
        %v1157 = vld [vmem:[%s280 + $0x60] sm:$0xff]
        %v1158 = vld [vmem:[%s280 + $0x68] sm:$0xff]
        %v1159 = vld [vmem:[%s280 + $0x70] sm:$0xff]
        %v1160 = vld [vmem:[%s280 + $0x78] sm:$0xff]
        %v1161 = vld [vmem:[%s280 + $0x80] sm:$0xff]
        %v1162 = vld [vmem:[%s280 + $0x88] sm:$0xff]
        %v1163 = vld [vmem:[%s280 + $0x90] sm:$0xff]
        %v1164 = vld [vmem:[%s280 + $0x98] sm:$0xff]
        %v1165 = vld [vmem:[%s280 + $0xa0] sm:$0xff]
        %v1166 = vld [vmem:[%s280 + $0xa8] sm:$0xff]
        %v1167 = vld [vmem:[%s280 + $0xb0] sm:$0xff]
        %v1168 = vld [vmem:[%s280 + $0xb8] sm:$0xff]
        %v1169 = vld [vmem:[%s280 + $0xc0] sm:$0xff]
        %v1170 = vld [vmem:[%s280 + $0xc8] sm:$0xff]
        %v1171 = vld [vmem:[%s280 + $0xd0] sm:$0xff]
        %v1172 = vld [vmem:[%s280 + $0xd8] sm:$0xff]
        %v1173 = vld [vmem:[%s280 + $0xe0] sm:$0xff]
        %v1174 = vld [vmem:[%s280 + $0xe8] sm:$0xff]
        %v1175 = vld [vmem:[%s280 + $0xf0] sm:$0xff]
        %v1176 = vld [vmem:[%s280 + $0xf8] sm:$0xff]
        %v1177 = vld [vmem:[%s280 + $0x100] sm:$0xff]
        %v1178 = vld [vmem:[%s280 + $0x108] sm:$0xff]
        %v1179 = vld [vmem:[%s280 + $0x110] sm:$0xff]
        %v1180 = vld [vmem:[%s280 + $0x118] sm:$0xff]
        %v1181 = vld [vmem:[%s280 + $0x120] sm:$0xff]
        %v1182 = vld [vmem:[%s280 + $0x128] sm:$0xff]
        %v1183 = vld [vmem:[%s280 + $0x130] sm:$0xff]
        %v1184 = vld [vmem:[%s280 + $0x138] sm:$0xff]
        %v1185 = vld [vmem:[%s280 + $0x140] sm:$0xff]
        %v1186 = vld [vmem:[%s280 + $0x148] sm:$0xff]
        %v1187 = vld [vmem:[%s280 + $0x150] sm:$0xff]
        %v1188 = vld [vmem:[%s280 + $0x158] sm:$0xff]
        %v1189 = vld [vmem:[%s280 + $0x160] sm:$0xff]
        %v1190 = vld [vmem:[%s280 + $0x168] sm:$0xff]
        %v1191 = vld [vmem:[%s280 + $0x170] sm:$0xff]
        %v1192 = vld [vmem:[%s280 + $0x178] sm:$0xff]
        %v1193 = vld [vmem:[%s280 + $0x180] sm:$0xff]
        %v1194 = vld [vmem:[%s280 + $0x188] sm:$0xff]
        %v1195 = vld [vmem:[%s280 + $0x190] sm:$0xff]
        %v1196 = vld [vmem:[%s280 + $0x198] sm:$0xff]
        %v1197 = vld [vmem:[%s280 + $0x1a0] sm:$0xff]
        %v1198 = vld [vmem:[%s280 + $0x1a8] sm:$0xff]
        %v1199 = vld [vmem:[%s280 + $0x1b0] sm:$0xff]
        %v1200 = vld [vmem:[%s280 + $0x1b8] sm:$0xff]
        %v1201 = vld [vmem:[%s280 + $0x1c0] sm:$0xff]
        %v1202 = vld [vmem:[%s280 + $0x1c8] sm:$0xff]
        %v1203 = vld [vmem:[%s280 + $0x1d0] sm:$0xff]
        %v1204 = vld [vmem:[%s280 + $0x1d8] sm:$0xff]
        %v1205 = vld [vmem:[%s280 + $0x1e0] sm:$0xff]
        %v1206 = vld [vmem:[%s280 + $0x1e8] sm:$0xff]
        %v1207 = vld [vmem:[%s280 + $0x1f0] sm:$0xff]
        %v1208 = vld [vmem:[%s280 + $0x1f8] sm:$0xff]
        %1209 = vmatprep.subr.mxu0 %v1176
        %1210 = vmatpush1.msra.mxu0 %v1175
        %1211 = vmatprep.subr.mxu0 %v1174
        %1212 = vmatpush1.msra.mxu0 %v1173
        %1213 = vmatprep.subr.mxu0 %v1172
        %1214 = vmatpush1.msra.mxu0 %v1171
        %1215 = vmatprep.subr.mxu0 %v1170
        %1216 = vmatpush1.msra.mxu0 %v1169
        %1217 = vmatprep.subr.mxu0 %v1168
        %1218 = vmatpush1.msra.mxu0 %v1167
        %1219 = vmatprep.subr.mxu0 %v1166
        %1220 = vmatpush1.msra.mxu0 %v1165
        %1221 = vmatprep.subr.mxu0 %v1164
        %1222 = vmatpush1.msra.mxu0 %v1163
        %1223 = vmatprep.subr.mxu0 %v1162
        %1224 = vmatpush1.msra.mxu0 %v1161
        %1225 = vmatprep.subr.mxu0 %v1160
        %1226 = vmatpush1.msra.mxu0 %v1159
        %1227 = vmatprep.subr.mxu0 %v1158
        %1228 = vmatpush1.msra.mxu0 %v1157
        %1229 = vmatprep.subr.mxu0 %v1156
        %1230 = vmatpush1.msra.mxu0 %v1155
        %1231 = vmatprep.subr.mxu0 %v1154
        %1232 = vmatpush1.msra.mxu0 %v1153
        %1233 = vmatprep.subr.mxu0 %v1152
        %1234 = vmatpush1.msra.mxu0 %v1151
        %1235 = vmatprep.subr.mxu0 %v1150
        %1236 = vmatpush1.msra.mxu0 %v1149
        %1237 = vmatprep.subr.mxu0 %v1148
        %1238 = vmatpush1.msra.mxu0 %v1147
        %1239 = vmatprep.subr.mxu0 %v1146
        %1240 = vmatpush1.msra.mxu0 %v1145
        %1241 = vmatprep.subr.mxu0 %v1208
        %1242 = vmatpush2.msra.mxu0 %v1207
        %1243 = vmatprep.subr.mxu0 %v1206
        %1244 = vmatpush2.msra.mxu0 %v1205
        %1245 = vmatprep.subr.mxu0 %v1204
        %1246 = vmatpush2.msra.mxu0 %v1203
        %1247 = vmatprep.subr.mxu0 %v1202
        %1248 = vmatpush2.msra.mxu0 %v1201
        %1249 = vmatprep.subr.mxu0 %v1200
        %1250 = vmatpush2.msra.mxu0 %v1199
        %1251 = vmatprep.subr.mxu0 %v1198
        %1252 = vmatpush2.msra.mxu0 %v1197
        %1253 = vmatprep.subr.mxu0 %v1196
        %1254 = vmatpush2.msra.mxu0 %v1195
        %1255 = vmatprep.subr.mxu0 %v1194
        %1256 = vmatpush2.msra.mxu0 %v1193
        %1257 = vmatprep.subr.mxu0 %v1192
        %1258 = vmatpush2.msra.mxu0 %v1191
        %1259 = vmatprep.subr.mxu0 %v1190
        %1260 = vmatpush2.msra.mxu0 %v1189
        %1261 = vmatprep.subr.mxu0 %v1188
        %1262 = vmatpush2.msra.mxu0 %v1187
        %1263 = vmatprep.subr.mxu0 %v1186
        %1264 = vmatpush2.msra.mxu0 %v1185
        %1265 = vmatprep.subr.mxu0 %v1184
        %1266 = vmatpush2.msra.mxu0 %v1183
        %1267 = vmatprep.subr.mxu0 %v1182
        %1268 = vmatpush2.msra.mxu0 %v1181
        %1269 = vmatprep.subr.mxu0 %v1180
        %1270 = vmatpush2.msra.mxu0 %v1179
        %1271 = vmatprep.subr.mxu0 %v1178
        %1272 = vmatpush2.msra.mxu0 %v1177
        %1273 = vmatprep.mubr.f32.mxu0 %v1082
        %1274 = vmatmul.mubr.f32.gmra.mxu0 %v1081
        %v1275 = vpop.f32.mrf.mxu0
        %v1276 = vadd.f32 0.0, %v1275
        %v1277 = vpop.f32.mrf.mxu0
        %v1278 = vadd.f32 0.0, %v1277
        %1279 = vmatprep.mubr.f32.mxu0 %v1084
        %1280 = vmatmul.mubr.f32.gmra.mxu0 %v1083
        %v1281 = vpop.f32.mrf.mxu0
        %v1282 = vadd.f32 0.0, %v1281
        %v1283 = vpop.f32.mrf.mxu0
        %v1284 = vadd.f32 0.0, %v1283
        %1285 = vmatprep.mubr.f32.mxu0 %v1086
        %1286 = vmatmul.mubr.f32.gmra.mxu0 %v1085
        %v1287 = vpop.f32.mrf.mxu0
        %v1288 = vadd.f32 0.0, %v1287
        %v1289 = vpop.f32.mrf.mxu0
        %v1290 = vadd.f32 0.0, %v1289
        %1291 = vmatprep.mubr.f32.mxu0 %v1088
        %1292 = vmatmul.mubr.f32.gmra.mxu0 %v1087
        %v1293 = vpop.f32.mrf.mxu0
        %v1294 = vadd.f32 0.0, %v1293
        %v1295 = vpop.f32.mrf.mxu0
        %v1296 = vadd.f32 0.0, %v1295
        %1297 = vmatprep.mubr.f32.mxu0 %v1090
        %1298 = vmatmul.mubr.f32.gmra.mxu0 %v1089
        %v1299 = vpop.f32.mrf.mxu0
        %v1300 = vadd.f32 0.0, %v1299
        %v1301 = vpop.f32.mrf.mxu0
        %v1302 = vadd.f32 0.0, %v1301
        %1303 = vmatprep.mubr.f32.mxu0 %v1092
        %1304 = vmatmul.mubr.f32.gmra.mxu0 %v1091
        %v1305 = vpop.f32.mrf.mxu0
        %v1306 = vadd.f32 0.0, %v1305
        %v1307 = vpop.f32.mrf.mxu0
        %v1308 = vadd.f32 0.0, %v1307
        %1309 = vmatprep.mubr.f32.mxu0 %v1094
        %1310 = vmatmul.mubr.f32.gmra.mxu0 %v1093
        %v1311 = vpop.f32.mrf.mxu0
        %v1312 = vadd.f32 0.0, %v1311
        %v1313 = vpop.f32.mrf.mxu0
        %v1314 = vadd.f32 0.0, %v1313
        %1315 = vmatprep.mubr.f32.mxu0 %v1096
        %1316 = vmatmul.mubr.f32.gmra.mxu0 %v1095
        %v1317 = vpop.f32.mrf.mxu0
        %v1318 = vadd.f32 0.0, %v1317
        %v1319 = vpop.f32.mrf.mxu0
        %v1320 = vadd.f32 0.0, %v1319
        %1321 = vmatprep.mubr.f32.mxu0 %v1098
        %1322 = vmatmul.mubr.f32.gmra.mxu0 %v1097
        %v1323 = vpop.f32.mrf.mxu0
        %v1324 = vadd.f32 0.0, %v1323
        %v1325 = vpop.f32.mrf.mxu0
        %v1326 = vadd.f32 0.0, %v1325
        %1327 = vmatprep.mubr.f32.mxu0 %v1100
        %1328 = vmatmul.mubr.f32.gmra.mxu0 %v1099
        %v1329 = vpop.f32.mrf.mxu0
        %v1330 = vadd.f32 0.0, %v1329
        %v1331 = vpop.f32.mrf.mxu0
        %v1332 = vadd.f32 0.0, %v1331
        %1333 = vmatprep.mubr.f32.mxu0 %v1102
        %1334 = vmatmul.mubr.f32.gmra.mxu0 %v1101
        %v1335 = vpop.f32.mrf.mxu0
        %v1336 = vadd.f32 0.0, %v1335
        %v1337 = vpop.f32.mrf.mxu0
        %v1338 = vadd.f32 0.0, %v1337
        %1339 = vmatprep.mubr.f32.mxu0 %v1104
        %1340 = vmatmul.mubr.f32.gmra.mxu0 %v1103
        %v1341 = vpop.f32.mrf.mxu0
        %v1342 = vadd.f32 0.0, %v1341
        %v1343 = vpop.f32.mrf.mxu0
        %v1344 = vadd.f32 0.0, %v1343
        %1345 = vmatprep.mubr.f32.mxu0 %v1106
        %1346 = vmatmul.mubr.f32.gmra.mxu0 %v1105
        %v1347 = vpop.f32.mrf.mxu0
        %v1348 = vadd.f32 0.0, %v1347
        %v1349 = vpop.f32.mrf.mxu0
        %v1350 = vadd.f32 0.0, %v1349
        %1351 = vmatprep.mubr.f32.mxu0 %v1108
        %1352 = vmatmul.mubr.f32.gmra.mxu0 %v1107
        %v1353 = vpop.f32.mrf.mxu0
        %v1354 = vadd.f32 0.0, %v1353
        %v1355 = vpop.f32.mrf.mxu0
        %v1356 = vadd.f32 0.0, %v1355
        %1357 = vmatprep.mubr.f32.mxu0 %v1110
        %1358 = vmatmul.mubr.f32.gmra.mxu0 %v1109
        %v1359 = vpop.f32.mrf.mxu0
        %v1360 = vadd.f32 0.0, %v1359
        %v1361 = vpop.f32.mrf.mxu0
        %v1362 = vadd.f32 0.0, %v1361
        %1363 = vmatprep.mubr.f32.mxu0 %v1112
        %1364 = vmatmul.mubr.f32.gmra.mxu0 %v1111
        %v1365 = vpop.f32.mrf.mxu0
        %v1366 = vadd.f32 0.0, %v1365
        %v1367 = vpop.f32.mrf.mxu0
        %v1368 = vadd.f32 0.0, %v1367
        %1369 = vdwg.mxu0
        %v1370 = vadd.f32 %v1113, %v1276
        %v1371 = vadd.f32 %v1114, %v1278
        %v1372 = vadd.f32 %v1115, %v1282
        %v1373 = vadd.f32 %v1116, %v1284
        %v1374 = vadd.f32 %v1117, %v1288
        %v1375 = vadd.f32 %v1118, %v1290
        %v1376 = vadd.f32 %v1119, %v1294
        %v1377 = vadd.f32 %v1120, %v1296
        %v1378 = vadd.f32 %v1121, %v1300
        %v1379 = vadd.f32 %v1122, %v1302
        %v1380 = vadd.f32 %v1123, %v1306
        %v1381 = vadd.f32 %v1124, %v1308
        %v1382 = vadd.f32 %v1125, %v1312
        %v1383 = vadd.f32 %v1126, %v1314
        %v1384 = vadd.f32 %v1127, %v1318
        %v1385 = vadd.f32 %v1128, %v1320
        %v1386 = vadd.f32 %v1129, %v1324
        %v1387 = vadd.f32 %v1130, %v1326
        %v1388 = vadd.f32 %v1131, %v1330
        %v1389 = vadd.f32 %v1132, %v1332
        %v1390 = vadd.f32 %v1133, %v1336
        %v1391 = vadd.f32 %v1134, %v1338
        %v1392 = vadd.f32 %v1135, %v1342
        %v1393 = vadd.f32 %v1136, %v1344
        %v1394 = vadd.f32 %v1137, %v1348
        %v1395 = vadd.f32 %v1138, %v1350
        %v1396 = vadd.f32 %v1139, %v1354
        %v1397 = vadd.f32 %v1140, %v1356
        %v1398 = vadd.f32 %v1141, %v1360
        %v1399 = vadd.f32 %v1142, %v1362
        %v1400 = vadd.f32 %v1143, %v1366
        %v1401 = vadd.f32 %v1144, %v1368
        %1402 = vst [vmem:[#allocation2] sm:$0xff] %v1370
        %1403 = vst [vmem:[#allocation2 + $0x8] sm:$0xff] %v1371
        %1404 = vst [vmem:[#allocation2 + $0x10] sm:$0xff] %v1372
        %1405 = vst [vmem:[#allocation2 + $0x18] sm:$0xff] %v1373
        %1406 = vst [vmem:[#allocation2 + $0x20] sm:$0xff] %v1374
        %1407 = vst [vmem:[#allocation2 + $0x28] sm:$0xff] %v1375
        %1408 = vst [vmem:[#allocation2 + $0x30] sm:$0xff] %v1376
        %1409 = vst [vmem:[#allocation2 + $0x38] sm:$0xff] %v1377
        %1410 = vst [vmem:[#allocation2 + $0x40] sm:$0xff] %v1378
        %1411 = vst [vmem:[#allocation2 + $0x48] sm:$0xff] %v1379
        %1412 = vst [vmem:[#allocation2 + $0x50] sm:$0xff] %v1380
        %1413 = vst [vmem:[#allocation2 + $0x58] sm:$0xff] %v1381
        %1414 = vst [vmem:[#allocation2 + $0x60] sm:$0xff] %v1382
        %1415 = vst [vmem:[#allocation2 + $0x68] sm:$0xff] %v1383
        %1416 = vst [vmem:[#allocation2 + $0x70] sm:$0xff] %v1384
        %1417 = vst [vmem:[#allocation2 + $0x78] sm:$0xff] %v1385
        %1418 = vst [vmem:[#allocation2 + $0x80] sm:$0xff] %v1386
        %1419 = vst [vmem:[#allocation2 + $0x88] sm:$0xff] %v1387
        %1420 = vst [vmem:[#allocation2 + $0x90] sm:$0xff] %v1388
        %1421 = vst [vmem:[#allocation2 + $0x98] sm:$0xff] %v1389
        %1422 = vst [vmem:[#allocation2 + $0xa0] sm:$0xff] %v1390
        %1423 = vst [vmem:[#allocation2 + $0xa8] sm:$0xff] %v1391
        %1424 = vst [vmem:[#allocation2 + $0xb0] sm:$0xff] %v1392
        %1425 = vst [vmem:[#allocation2 + $0xb8] sm:$0xff] %v1393
        %1426 = vst [vmem:[#allocation2 + $0xc0] sm:$0xff] %v1394
        %1427 = vst [vmem:[#allocation2 + $0xc8] sm:$0xff] %v1395
        %1428 = vst [vmem:[#allocation2 + $0xd0] sm:$0xff] %v1396
        %1429 = vst [vmem:[#allocation2 + $0xd8] sm:$0xff] %v1397
        %1430 = vst [vmem:[#allocation2 + $0xe0] sm:$0xff] %v1398
        %1431 = vst [vmem:[#allocation2 + $0xe8] sm:$0xff] %v1399
        %1432 = vst [vmem:[#allocation2 + $0xf0] sm:$0xff] %v1400
        %1433 = vst [vmem:[#allocation2 + $0xf8] sm:$0xff] %v1401
        %p1434 = scmp.eq.s32.totalorder %s26, 1
        // Predicated region
        $region53: #{cpm_ffn.1} parent=35 // pred_check
          %p1435 = pneg %p1434
        $region54: #{cpm_ffn.1} parent=35 // pred_check_branch
          %1437 = sbr.rel (%p1435) target = $region56
        $region55: #{cpm_ffn.1} parent=35 // pred_region
          %v1438 = vld [vmem:[#allocation2] sm:$0xff]
          %v1439 = vld [vmem:[#allocation2 + $0x8] sm:$0xff]
          %v1440 = vld [vmem:[#allocation2 + $0x10] sm:$0xff]
          %v1441 = vld [vmem:[#allocation2 + $0x18] sm:$0xff]
          %v1442 = vld [vmem:[#allocation2 + $0x20] sm:$0xff]
          %v1443 = vld [vmem:[#allocation2 + $0x28] sm:$0xff]
          %v1444 = vld [vmem:[#allocation2 + $0x30] sm:$0xff]
          %v1445 = vld [vmem:[#allocation2 + $0x38] sm:$0xff]
          %v1446 = vld [vmem:[#allocation2 + $0x40] sm:$0xff]
          %v1447 = vld [vmem:[#allocation2 + $0x48] sm:$0xff]
          %v1448 = vld [vmem:[#allocation2 + $0x50] sm:$0xff]
          %v1449 = vld [vmem:[#allocation2 + $0x58] sm:$0xff]
          %v1450 = vld [vmem:[#allocation2 + $0x60] sm:$0xff]
          %v1451 = vld [vmem:[#allocation2 + $0x68] sm:$0xff]
          %v1452 = vld [vmem:[#allocation2 + $0x70] sm:$0xff]
          %v1453 = vld [vmem:[#allocation2 + $0x78] sm:$0xff]
          %v1454 = vld [vmem:[#allocation2 + $0x80] sm:$0xff]
          %v1455 = vld [vmem:[#allocation2 + $0x88] sm:$0xff]
          %v1456 = vld [vmem:[#allocation2 + $0x90] sm:$0xff]
          %v1457 = vld [vmem:[#allocation2 + $0x98] sm:$0xff]
          %v1458 = vld [vmem:[#allocation2 + $0xa0] sm:$0xff]
          %v1459 = vld [vmem:[#allocation2 + $0xa8] sm:$0xff]
          %v1460 = vld [vmem:[#allocation2 + $0xb0] sm:$0xff]
          %v1461 = vld [vmem:[#allocation2 + $0xb8] sm:$0xff]
          %v1462 = vld [vmem:[#allocation2 + $0xc0] sm:$0xff]
          %v1463 = vld [vmem:[#allocation2 + $0xc8] sm:$0xff]
          %v1464 = vld [vmem:[#allocation2 + $0xd0] sm:$0xff]
          %v1465 = vld [vmem:[#allocation2 + $0xd8] sm:$0xff]
          %v1466 = vld [vmem:[#allocation2 + $0xe0] sm:$0xff]
          %v1467 = vld [vmem:[#allocation2 + $0xe8] sm:$0xff]
          %v1468 = vld [vmem:[#allocation2 + $0xf0] sm:$0xff]
          %v1469 = vld [vmem:[#allocation2 + $0xf8] sm:$0xff]
          %1470 = vst [vmem:[%s337] sm:$0xff] %v1438
          %1471 = vst [vmem:[%s337 + $0x8] sm:$0xff] %v1439
          %1472 = vst [vmem:[%s337 + $0x10] sm:$0xff] %v1440
          %1473 = vst [vmem:[%s337 + $0x18] sm:$0xff] %v1441
          %1474 = vst [vmem:[%s337 + $0x20] sm:$0xff] %v1442
          %1475 = vst [vmem:[%s337 + $0x28] sm:$0xff] %v1443
          %1476 = vst [vmem:[%s337 + $0x30] sm:$0xff] %v1444
          %1477 = vst [vmem:[%s337 + $0x38] sm:$0xff] %v1445
          %1478 = vst [vmem:[%s337 + $0x40] sm:$0xff] %v1446
          %1479 = vst [vmem:[%s337 + $0x48] sm:$0xff] %v1447
          %1480 = vst [vmem:[%s337 + $0x50] sm:$0xff] %v1448
          %1481 = vst [vmem:[%s337 + $0x58] sm:$0xff] %v1449
          %1482 = vst [vmem:[%s337 + $0x60] sm:$0xff] %v1450
          %1483 = vst [vmem:[%s337 + $0x68] sm:$0xff] %v1451
          %1484 = vst [vmem:[%s337 + $0x70] sm:$0xff] %v1452
          %1485 = vst [vmem:[%s337 + $0x78] sm:$0xff] %v1453
          %1486 = vst [vmem:[%s337 + $0x80] sm:$0xff] %v1454
          %1487 = vst [vmem:[%s337 + $0x88] sm:$0xff] %v1455
          %1488 = vst [vmem:[%s337 + $0x90] sm:$0xff] %v1456
          %1489 = vst [vmem:[%s337 + $0x98] sm:$0xff] %v1457
          %1490 = vst [vmem:[%s337 + $0xa0] sm:$0xff] %v1458
          %1491 = vst [vmem:[%s337 + $0xa8] sm:$0xff] %v1459
          %1492 = vst [vmem:[%s337 + $0xb0] sm:$0xff] %v1460
          %1493 = vst [vmem:[%s337 + $0xb8] sm:$0xff] %v1461
          %1494 = vst [vmem:[%s337 + $0xc0] sm:$0xff] %v1462
          %1495 = vst [vmem:[%s337 + $0xc8] sm:$0xff] %v1463
          %1496 = vst [vmem:[%s337 + $0xd0] sm:$0xff] %v1464
          %1497 = vst [vmem:[%s337 + $0xd8] sm:$0xff] %v1465
          %1498 = vst [vmem:[%s337 + $0xe0] sm:$0xff] %v1466
          %1499 = vst [vmem:[%s337 + $0xe8] sm:$0xff] %v1467
          %1500 = vst [vmem:[%s337 + $0xf0] sm:$0xff] %v1468
          %1501 = vst [vmem:[%s337 + $0xf8] sm:$0xff] %v1469
        $region56: #{cpm_ffn.1} parent=35 // pred_fallthru
          _
        %s1502 = smul.u32 16, %s25
        %p1503 = scmp.lt.s32.totalorder %s1502, 31
        %s1504 = scalar_select %p1503, %s1502, 31
        %s1505 = smul.addr %s1504, 2
        %s1506 = smul.addr %s1505, 8
        %s1507 = scalar_lea.vmem %s4, %s1506
        // Predicated region
        $region57: #{cpm_ffn.1} parent=35 // pred_check
          %p1508 = pneg %p155
        $region58: #{cpm_ffn.1} parent=35 // pred_check_branch
          %1510 = sbr.rel (%p1508) target = $region60
        $region59: #{cpm_ffn.1} parent=35 // pred_region
          %s1511 = smul.u32 16, %s25
        $region60: #{cpm_ffn.1} parent=35 // pred_fallthru
          _
      $region36: #{cpm_ffn.1} parent=5 // pred_fallthru
        _
      %p1512 = scmp.le.s32.totalorder 2, %s16
      // Predicated region
      $region61: #{cpm_ffn.1} parent=5 // pred_check
        %p1513 = pneg %p1512
      $region62: #{cpm_ffn.1} parent=5 // pred_check_branch
        %1515 = sbr.rel (%p1513) target = $region64
      $region63: #{cpm_ffn.1} parent=5 // pred_region
        %s1516 = ssub.s32 %s16, 2
        // Predicated region
        $region65: #{cpm_ffn.1} parent=63 // pred_check
          %p1517 = pneg %p161
        $region66: #{cpm_ffn.1} parent=63 // pred_check_branch
          %1519 = sbr.rel (%p1517) target = $region68
        $region67: #{cpm_ffn.1} parent=63 // pred_region
          %s1520 = smul.u32 16, %s27
          %p1521 = scmp.lt.s32.totalorder %s1520, 31
          %s1522 = scalar_select %p1521, %s1520, 31
          %s1523 = smul.addr %s1522, 2
          %s1524 = smul.addr %s1523, 8
          %s1525 = scalar_lea.vmem %s4, %s1524
        $region68: #{cpm_ffn.1} parent=63 // pred_fallthru
          _
      $region64: #{cpm_ffn.1} parent=5 // pred_fallthru
        _
    $region6: #{cpm_ffn.1} parent=1 // loop_footer
      %s20 = sadd.s32 1, %s16
    $region7: #{cpm_ffn.1} parent=1 // loop_footer_branch
      %15 = sbr.rel target = $region3
    $region8: #{cpm_ffn.1} parent=1 // loop_exit
      _
    %1526 = vsyncpa [#allocation4], 1
    %s1527 = scalar_lea.sflag [#allocation4], 1
    %1528 = vsyncpa %s1527, 1
    %1529 = vsyncpa [#allocation6], 1
    %s1530 = scalar_lea.sflag [#allocation6], 1
    %1531 = vsyncpa %s1530, 1

</llo_original>
